<compile_context>
chip_gen: v7x
topology: tpu7x:2x2x1
jax: 0.10.0
libtpu: 0.0.40
codegen_flags: <defaults>
</compile_context>

<pallas_src>
import numpy as np
import jax
import jax.numpy as jnp
from jax.experimental import pallas as pl
from jax.experimental.pallas import tpu as pltpu


_LANE = 128
_ROW_BUCKET = 512        # pad row counts to a multiple of this (recompile bucketing)
_MIN_PALLAS_ROWS = 256   # below this the pallas_call fixed cost dominates -> jnp path
_MAX_BM = 8192


def _round_up(x, m):
    return ((x + m - 1) // m) * m


def _vmem_capacity_bytes():
    """Physical VMEM of the attached TPU (v5e/v6e: 128 MiB, v7x: 64 MiB)."""
    try:
        info = pltpu.get_tpu_info()
        for name in ("vmem_capacity_bytes", "vmem_size_bytes", "vmem_bytes"):
            cap = getattr(info, name, None)
            if cap:
                return int(cap)
    except Exception:
        pass
    return 64 * 1024 * 1024   # conservative (v7x-safe) default


def _padded_width_bytes(cols, itemsize):
    # a (rows, cols) VMEM block is lane-padded to a multiple of 128 columns
    return _round_up(max(int(cols), 1), _LANE) * itemsize


def _pick_bm(rows, stream_bytes_per_row, temp_bytes_per_row):
    """Row-tile size: as large as the per-generation VMEM budget allows, but
    guaranteeing >= 2 grid steps so both v7x TensorCores get work."""
    cap = _vmem_capacity_bytes()
    budget = min(cap // 2, 48 * 1024 * 1024)
    per_row = 2 * stream_bytes_per_row + temp_bytes_per_row   # x2: double-buffered blocks
    bm = budget // max(per_row, 1)
    bm = max(256, min(_MAX_BM, (bm // 256) * 256))
    half = _round_up(pl.cdiv(rows, 2), 256)                   # keep >= 2 grid steps (v7x)
    bm = min(bm, max(256, half))
    return min(bm, rows)


def _vmem_limit_bytes():
    cap = _vmem_capacity_bytes()
    return int(min(cap * 3 // 4, 96 * 1024 * 1024))


def _pad_rows(x, rows):
    pad = rows - x.shape[0]
    if pad == 0:
        return x
    return jnp.pad(x, ((0, pad), (0, 0)))


def _resident_spec(arr):
    # weights/biases: one block == whole array, same block for every grid step
    return pl.BlockSpec(arr.shape, lambda i: (0,) * arr.ndim)


# ----------------------------------------------------------------------------
# Pallas kernels
# ----------------------------------------------------------------------------
def _node_mlp_kernel(x_ref, w1_ref, b1_ref, w3_ref, b3_ref, w2_ref, b2_ref, o_ref):
    """indiv_util = L2(relu(L3(relu(L1(x))))) for one row tile (x already bf16)."""
    h = jnp.dot(x_ref[...], w1_ref[...], preferred_element_type=jnp.float32) + b1_ref[...]
    h = jnp.maximum(h, 0.0).astype(jnp.bfloat16)
    h = jnp.dot(h, w3_ref[...], preferred_element_type=jnp.float32) + b3_ref[...]
    h = jnp.maximum(h, 0.0).astype(jnp.bfloat16)
    o_ref[...] = jnp.dot(h, w2_ref[...], preferred_element_type=jnp.float32) + b2_ref[...]


def _edge_fused_kernel(xu_ref, xr_ref, pexp_ref, q_ref,
                       w1_ref, b1_ref, w3_ref, b3_ref,
                       w2u_ref, w2r_ref, b2c_ref, s_ref,
                       umsg_ref, esum_ref):
    """Pairwise-utility MLP with its graph consumer fused in.

    util_vals[e, i, j] is produced flat at column c = j*A + i:
        util_t[e, c] = 0.5 * (mlp_u[e, c] + mlp_r[e, perm(c)])
    (the transpose permutation is folded into w2r / b2c on the host).
    The consumer contraction over j uses a per-edge weighting pexp[e, j*A+i] =
    p[e, j] and the constant 0/1 group-sum matrix S[c, i] = (c % A == i):
        u_message[e, i] = sum_c util_t[e, c] * pexp[e, c] * S[c, i]
        edge_all_sum[e] = sum_i u_message[e, i] * q[e, i]
    so the [E, A*A] tensor never leaves VMEM.
    """
    def trunk(x):
        h = jnp.dot(x, w1_ref[...], preferred_element_type=jnp.float32) + b1_ref[...]
        h = jnp.maximum(h, 0.0).astype(jnp.bfloat16)
        h = jnp.dot(h, w3_ref[...], preferred_element_type=jnp.float32) + b3_ref[...]
        return jnp.maximum(h, 0.0).astype(jnp.bfloat16)

    hu = trunk(xu_ref[...])
    hr = trunk(xr_ref[...])
    acc = jnp.dot(hu, w2u_ref[...], preferred_element_type=jnp.float32)
    acc = acc + jnp.dot(hr, w2r_ref[...], preferred_element_type=jnp.float32)
    util_t = 0.5 * acc + b2c_ref[...]                               # [bm, A*A] f32

    weighted = (util_t * pexp_ref[...]).astype(jnp.bfloat16)        # [bm, A*A]
    umsg = jnp.dot(weighted, s_ref[...], preferred_element_type=jnp.float32)  # [bm, A]
    umsg_ref[...] = umsg
    esum_ref[...] = jnp.sum(umsg * q_ref[...], axis=-1, keepdims=True)        # [bm, 1]


# ----------------------------------------------------------------------------
# pallas_call wrappers
# ----------------------------------------------------------------------------
def node_mlp_pallas(x, w1, b1, w3, b3, w2, b2):
    rows, din = x.shape
    dh = w1.shape[1]
    dout = w2.shape[1]

    stream = _padded_width_bytes(din, 2) + _padded_width_bytes(dout, 4)
    temps = 2 * _padded_width_bytes(dh, 2) + _padded_width_bytes(dout, 4)
    bm = _pick_bm(rows, stream, temps)
    grid = (pl.cdiv(rows, bm),)

    row = lambda d: pl.BlockSpec((bm, d), lambda i: (i, 0))
    flops = 2 * rows * (din * dh + dh * dh + dh * dout)
    bytes_accessed = (2 * rows * din + 4 * rows * dout
                      + 2 * (din * dh + dh * dh + dh * dout) + 4 * (2 * dh + dout))

    return pl.pallas_call(
        _node_mlp_kernel,
        out_shape=jax.ShapeDtypeStruct((rows, dout), jnp.float32),
        grid=grid,
        in_specs=[row(din),
                  _resident_spec(w1), _resident_spec(b1),
                  _resident_spec(w3), _resident_spec(b3),
                  _resident_spec(w2), _resident_spec(b2)],
        out_specs=row(dout),
        compiler_params=pltpu.CompilerParams(
            dimension_semantics=("parallel",),
            vmem_limit_bytes=_vmem_limit_bytes()),
        cost_estimate=pl.CostEstimate(flops=flops, transcendentals=0,
                                      bytes_accessed=bytes_accessed),
    )(x, w1, b1, w3, b3, w2, b2)


def edge_mlp_fused_pallas(xu, xr, pexp, q, w1, b1, w3, b3, w2u, w2r, b2c, s_mat):
    rows, din = xu.shape
    dh = w1.shape[1]
    aa = w2u.shape[1]       # A*A
    a = s_mat.shape[1]      # A

    stream = (2 * _padded_width_bytes(din, 2)     # xu, xr (bf16)
              + _padded_width_bytes(aa, 4)        # pexp (f32)
              + 3 * _padded_width_bytes(a, 4))    # q, umsg, esum (f32, lane-padded)
    temps = 2 * _padded_width_bytes(dh, 2) + 3 * _padded_width_bytes(aa, 4)
    bm = _pick_bm(rows, stream, temps)
    grid = (pl.cdiv(rows, bm),)

    row = lambda d: pl.BlockSpec((bm, d), lambda i: (i, 0))
    flops = 2 * rows * (2 * din * dh + 2 * dh * dh + 2 * dh * aa + aa * a)
    bytes_accessed = (rows * (2 * 2 * din + 4 * aa + 4 * a + 4 * a + 4)
                      + 2 * (din * dh + dh * dh + 2 * dh * aa + aa * a)
                      + 4 * (2 * dh + aa))

    return pl.pallas_call(
        _edge_fused_kernel,
        out_shape=(jax.ShapeDtypeStruct((rows, a), jnp.float32),
                   jax.ShapeDtypeStruct((rows, 1), jnp.float32)),
        grid=grid,
        in_specs=[row(din), row(din), row(aa), row(a),
                  _resident_spec(w1), _resident_spec(b1),
                  _resident_spec(w3), _resident_spec(b3),
                  _resident_spec(w2u), _resident_spec(w2r),
                  _resident_spec(b2c), _resident_spec(s_mat)],
        out_specs=(row(a), row(1)),
        compiler_params=pltpu.CompilerParams(
            dimension_semantics=("parallel",),
            vmem_limit_bytes=_vmem_limit_bytes()),
        cost_estimate=pl.CostEstimate(flops=flops, transcendentals=0,
                                      bytes_accessed=bytes_accessed),
    )(xu, xr, pexp, q, w1, b1, w3, b3, w2u, w2r, b2c, s_mat)


# ----------------------------------------------------------------------------
# Plain-jnp fallbacks (tiny problems / reference numerics)
# ----------------------------------------------------------------------------
def _mlp3_jnp(x, w1, b1, w3, b3, w2, b2):
    h = jnp.dot(x, w1, preferred_element_type=jnp.float32) + b1
    h = jnp.maximum(h, 0.0).astype(jnp.bfloat16)
    h = jnp.dot(h, w3, preferred_element_type=jnp.float32) + b3
    h = jnp.maximum(h, 0.0).astype(jnp.bfloat16)
    return jnp.dot(h, w2, preferred_element_type=jnp.float32) + b2


def _edge_fused_jnp(xu, xr, pexp, q, w1, b1, w3, b3, w2u, w2r, b2c, s_mat):
    # s_mat unused here: exact group-sum via reshape instead.
    del s_mat
    def trunk(x):
        h = jnp.maximum(jnp.dot(x, w1, preferred_element_type=jnp.float32) + b1, 0.0)
        h = h.astype(jnp.bfloat16)
        h = jnp.maximum(jnp.dot(h, w3, preferred_element_type=jnp.float32) + b3, 0.0)
        return h.astype(jnp.bfloat16)
    hu, hr = trunk(xu), trunk(xr)
    util_t = 0.5 * (jnp.dot(hu, w2u, preferred_element_type=jnp.float32)
                    + jnp.dot(hr, w2r, preferred_element_type=jnp.float32)) + b2c
    e = util_t.shape[0]
    a = q.shape[1]
    weighted = (util_t * pexp).reshape(e, a, a)      # [E, j, i]
    umsg = weighted.sum(axis=1)                      # sum over j -> [E, A]
    esum = jnp.sum(umsg * q, axis=-1, keepdims=True)
    return umsg, esum


# ----------------------------------------------------------------------------
# UtilLayer (pair_comp='avg') in JAX + Pallas
# ----------------------------------------------------------------------------
class UtilLayerPallas:
    def __init__(self, dim_in_node, mid_pair, mid_nodes, num_acts,
                 pair_comp='avg', mid_pair_out=8, seed=0):
        assert pair_comp == 'avg'
        # TODO(synk): pair_comp == 'bmm' branch (bmm of [A, mid_pair_out] factors) not implemented.
        self.num_acts = num_acts
        self.mid_pair = mid_pair
        self.mid_nodes = mid_nodes

        key = jax.random.PRNGKey(seed)
        ks = jax.random.split(key, 12)

        def lin(kw, kb, din, dout):
            w = jax.random.normal(kw, (din, dout), jnp.float32) * 0.1
            b = jax.random.normal(kb, (1, dout), jnp.float32) * 0.1
            return w, b

        A = num_acts
        # edge (pairwise) MLP: 3*dim_in_node -> mid_pair -> mid_pair -> A*A
        ju1_w, ju1_b = lin(ks[0], ks[1], 3 * dim_in_node, mid_pair)
        ju3_w, ju3_b = lin(ks[2], ks[3], mid_pair, mid_pair)
        ju2_w, ju2_b = lin(ks[4], ks[5], mid_pair, A * A)
        # node (individual) MLP: 2*dim_in_node -> mid_nodes -> mid_nodes -> A
        iu1_w, iu1_b = lin(ks[6], ks[7], 2 * dim_in_node, mid_nodes)
        iu3_w, iu3_b = lin(ks[8], ks[9], mid_nodes, mid_nodes)
        iu2_w, iu2_b = lin(ks[10], ks[11], mid_nodes, A)

        # Resident bf16 matmul weights; f32 biases.
        self.ju1_w, self.ju1_b = ju1_w.astype(jnp.bfloat16), ju1_b
        self.ju3_w, self.ju3_b = ju3_w.astype(jnp.bfloat16), ju3_b

        # util_vals[e, i, j] is produced flat at column c = j*A + i ("T layout"):
        #   util_t[:, j*A+i] = 0.5*(mlp_u[:, j*A+i] + mlp_r[:, i*A+j])
        # so the u branch keeps the original columns and the reflected branch gets
        # the transpose permutation folded into its final-layer weights/bias.
        perm = np.arange(A * A).reshape(A, A).T.reshape(-1)
        self.ju2_wu = ju2_w.astype(jnp.bfloat16)
        self.ju2_wr = ju2_w[:, perm].astype(jnp.bfloat16)
        self.ju2_bc = 0.5 * (ju2_b + ju2_b[:, perm])       # f32 combined bias
        # group-sum matrix for the fused consumer: S[c, i] = 1 iff c % A == i
        s = (np.arange(A * A)[:, None] % A == np.arange(A)[None, :]).astype(np.float32)
        self.s_mat = jnp.asarray(s).astype(jnp.bfloat16)

        self.iu1_w, self.iu1_b = iu1_w.astype(jnp.bfloat16), iu1_b
        self.iu3_w, self.iu3_b = iu3_w.astype(jnp.bfloat16), iu3_b
        self.iu2_w, self.iu2_b = iu2_w.astype(jnp.bfloat16), iu2_b

        # original-orientation copies (for the unfused pure-JAX reference)
        self._ju2_w = ju2_w.astype(jnp.bfloat16)
        self._ju2_b = ju2_b

    # ---- kernel dispatch (Pallas for big row counts, fused jnp otherwise) ----
    def _node_utils(self, node_feats_u):
        # NOTE: in a real pipeline the feature producer should emit bf16 so this
        # cast fuses upstream; here it is a cheap standalone op.
        x = node_feats_u.astype(jnp.bfloat16)
        n = x.shape[0]
        p = (self.iu1_w, self.iu1_b, self.iu3_w, self.iu3_b, self.iu2_w, self.iu2_b)
        if n < _MIN_PALLAS_ROWS:
            return _mlp3_jnp(x, *p)
        rows = _round_up(n, _ROW_BUCKET)
        out = node_mlp_pallas(_pad_rows(x, rows), *p)
        return out[:n]

    def _edge_utils(self, xu, xr, pvec, qvec):
        A = self.num_acts
        e = xu.shape[0]
        xu = xu.astype(jnp.bfloat16)
        xr = xr.astype(jnp.bfloat16)
        # pexp[:, j*A + i] = p[:, j]   (matches the kernel's "T layout")
        pexp = jnp.repeat(pvec.astype(jnp.float32), A, axis=1)
        qvec = qvec.astype(jnp.float32)
        params = (self.ju1_w, self.ju1_b, self.ju3_w, self.ju3_b,
                  self.ju2_wu, self.ju2_wr, self.ju2_bc, self.s_mat)
        if e < _MIN_PALLAS_ROWS:
            return _edge_fused_jnp(xu, xr, pexp, qvec, *params)
        rows = _round_up(e, _ROW_BUCKET)
        umsg, esum = edge_mlp_fused_pallas(
            _pad_rows(xu, rows), _pad_rows(xr, rows),
            _pad_rows(pexp, rows), _pad_rows(qvec, rows), *params)
        return umsg[:e], esum[:e]

    # ---- full forward ---------------------------------------------------------
    def forward(self, src, dst, batch_num_nodes, edge_feats_u, node_feats_u,
                edge_feat_reflected_u, mode='train',
                node_probability=None, joint_acts=None):
        A = self.num_acts
        N = node_feats_u.shape[0]
        E = edge_feats_u.shape[0]
        B = len(batch_num_nodes)

        src = jnp.asarray(src, jnp.int32)
        dst = jnp.asarray(dst, jnp.int32)

        node_graph_ids = jnp.asarray(
            np.repeat(np.arange(B), np.asarray(batch_num_nodes)), jnp.int32)
        zero_indexes = np.concatenate([[0], np.cumsum(batch_num_nodes)[:-1]]).astype(np.int64)
        n_weights = np.zeros((N, 1), np.float32)
        n_weights[zero_indexes] = 1.0
        n_weights = jnp.asarray(n_weights)
        mod_weights = 1.0 - n_weights

        # individual utilities (Pallas node MLP)
        indiv_util = self._node_utils(node_feats_u)                         # [N, A]

        # pairwise utilities with the graph consumer fused into the kernel
        if 'inference' in mode:
            probs = jnp.asarray(node_probability, jnp.float32)              # [N, A]
            pvec = probs[src]
            qvec = probs[dst]
        else:
            acts = jnp.asarray(joint_acts, jnp.int32)                       # [N]
            pvec = jax.nn.one_hot(acts[src], A, dtype=jnp.float32)
            qvec = jnp.zeros((E, A), jnp.float32)                           # esum unused in train

        u_message, edge_all_sum = self._edge_utils(
            edge_feats_u, edge_feat_reflected_u, pvec, qvec)                # [E, A], [E, 1]

        if 'inference' in mode:
            util_dst = jax.ops.segment_sum(u_message, dst, num_segments=N)             # [N, A]
            expected_indiv = jnp.sum(indiv_util * probs, axis=-1, keepdims=True)       # [N, 1]

            zero_idx = jnp.asarray(zero_indexes, jnp.int32)
            nc_zero_weight = jnp.where(
                jnp.logical_or(jnp.isin(src, zero_idx), jnp.isin(dst, zero_idx)),
                0.0, 0.5)[:, None]                                                     # [E, 1]
            edge_graph_ids = node_graph_ids[src]

            total_connected = jax.ops.segment_sum(util_dst * n_weights,
                                                  node_graph_ids, num_segments=B)      # [B, A]
            total_n_connected = jax.ops.segment_sum(edge_all_sum * nc_zero_weight,
                                                    edge_graph_ids, num_segments=B)    # [B, 1]
            total_exp_others = jax.ops.segment_sum(expected_indiv * mod_weights,
                                                   node_graph_ids, num_segments=B)     # [B, 1]
            total_indiv_zero = jax.ops.segment_sum(indiv_util * n_weights,
                                                   node_graph_ids, num_segments=B)     # [B, A]
            return total_connected + total_n_connected + (total_exp_others + total_indiv_zero)

        # train path
        u_msg_sum = jax.ops.segment_sum(u_message, dst, num_segments=N)                # [N, A]
        totals = indiv_util + 0.5 * u_msg_sum
        acts = jnp.asarray(joint_acts, jnp.int32)
        utils_sum_all = jnp.take_along_axis(totals, acts[:, None], axis=-1)            # [N, 1]
        q_values = jax.ops.segment_sum(utils_sum_all, node_graph_ids, num_segments=B)  # [B, 1]
        return q_values

    # ---- unfused pure-JAX reference (same bf16 weights) for tolerance checks ----
    def forward_reference(self, src, dst, batch_num_nodes, edge_feats_u, node_feats_u,
                          edge_feat_reflected_u, mode='train',
                          node_probability=None, joint_acts=None):
        A = self.num_acts
        N = node_feats_u.shape[0]
        E = edge_feats_u.shape[0]
        B = len(batch_num_nodes)
        src = jnp.asarray(src, jnp.int32)
        dst = jnp.asarray(dst, jnp.int32)
        node_graph_ids = jnp.asarray(
            np.repeat(np.arange(B), np.asarray(batch_num_nodes)), jnp.int32)
        zero_indexes = np.concatenate([[0], np.cumsum(batch_num_nodes)[:-1]]).astype(np.int64)
        n_weights = np.zeros((N, 1), np.float32)
        n_weights[zero_indexes] = 1.0
        n_weights = jnp.asarray(n_weights)
        mod_weights = 1.0 - n_weights

        indiv_util = _mlp3_jnp(node_feats_u.astype(jnp.bfloat16),
                               self.iu1_w, self.iu1_b, self.iu3_w, self.iu3_b,
                               self.iu2_w, self.iu2_b)
        mlp_u = _mlp3_jnp(edge_feats_u.astype(jnp.bfloat16),
                          self.ju1_w, self.ju1_b, self.ju3_w, self.ju3_b,
                          self._ju2_w, self._ju2_b).reshape(E, A, A)
        mlp_r = _mlp3_jnp(edge_feat_reflected_u.astype(jnp.bfloat16),
                          self.ju1_w, self.ju1_b, self.ju3_w, self.ju3_b,
                          self._ju2_w, self._ju2_b).reshape(E, A, A)
        util_vals = ((mlp_u + jnp.transpose(mlp_r, (0, 2, 1))) / 2.0).transpose(0, 2, 1)

        if 'inference' in mode:
            probs = jnp.asarray(node_probability, jnp.float32)
            src_prob, dst_prob = probs[src], probs[dst]
            edge_all_sum = jnp.sum(util_vals * src_prob[:, None, :] * dst_prob[:, :, None],
                                   axis=(-1, -2))[:, None]
            u_message = jnp.sum(util_vals * src_prob[:, None, :], axis=-1)
            util_dst = jax.ops.segment_sum(u_message, dst, num_segments=N)
            expected_indiv = jnp.sum(indiv_util * probs, axis=-1, keepdims=True)
            zero_idx = jnp.asarray(zero_indexes, jnp.int32)
            nc_zero_weight = jnp.where(
                jnp.logical_or(jnp.isin(src, zero_idx), jnp.isin(dst, zero_idx)),
                0.0, 0.5)[:, None]
            edge_graph_ids = node_graph_ids[src]
            total_connected = jax.ops.segment_sum(util_dst * n_weights,
                                                  node_graph_ids, num_segments=B)
            total_n_connected = jax.ops.segment_sum(edge_all_sum * nc_zero_weight,
                                                    edge_graph_ids, num_segments=B)
            total_exp_others = jax.ops.segment_sum(expected_indiv * mod_weights,
                                                   node_graph_ids, num_segments=B)
            total_indiv_zero = jax.ops.segment_sum(indiv_util * n_weights,
                                                   node_graph_ids, num_segments=B)
            return total_connected + total_n_connected + (total_exp_others + total_indiv_zero)

        acts = jnp.asarray(joint_acts, jnp.int32)
        acts_src = acts[src]
        u_msg = jnp.take_along_axis(util_vals, acts_src[:, None, None], axis=-1)[..., 0]
        u_msg_sum = jax.ops.segment_sum(u_msg, dst, num_segments=N)
        totals = indiv_util + 0.5 * u_msg_sum
        utils_sum_all = jnp.take_along_axis(totals, acts[:, None], axis=-1)
        return jax.ops.segment_sum(utils_sum_all, node_graph_ids, num_segments=B)


# ----------------------------------------------------------------------------
# Demo
# ----------------------------------------------------------------------------
def _build_complete_graph_batch(num_graphs, nodes_per_graph):
    src_list, dst_list, batch_num_nodes = [], [], []
    offset = 0
    for _ in range(num_graphs):
        n = nodes_per_graph
        batch_num_nodes.append(n)
        for i in range(n):
            for j in range(n):
                if i != j:
                    src_list.append(offset + i)
                    dst_list.append(offset + j)
        offset += n
    return src_list, dst_list, batch_num_nodes


if __name__ == "__main__":
    dim_in_node, mid_pair, mid_nodes, num_acts = 8, 32, 32, 4
    layer = UtilLayerPallas(dim_in_node, mid_pair, mid_nodes, num_acts, pair_comp='avg')

    # ---- case 1: big enough that both kernels take the Pallas path ----
    src_l, dst_l, batch_num_nodes = _build_complete_graph_batch(16, 17)   # N=272, E=4352
    N, E = sum(batch_num_nodes), len(src_l)

    key = jax.random.PRNGKey(0)
    k1, k2, k3, k4, k5 = jax.random.split(key, 5)
    node_feats = jax.random.normal(k1, (N, 2 * dim_in_node), jnp.float32)
    edge_feats = jax.random.normal(k2, (E, 3 * dim_in_node), jnp.float32)
    edge_feats_refl = jax.random.normal(k3, (E, 3 * dim_in_node), jnp.float32)
    node_prob = jax.nn.softmax(jax.random.normal(k4, (N, num_acts), jnp.float32), axis=-1)
    joint_acts = np.asarray(jax.random.randint(k5, (N,), 0, num_acts)).tolist()

    q_values = layer.forward(src_l, dst_l, batch_num_nodes, edge_feats, node_feats,
                             edge_feats_refl, mode='train', joint_acts=joint_acts)
    q_values = jax.block_until_ready(q_values)
    assert q_values.shape == (len(batch_num_nodes), 1)
    q_ref = layer.forward_reference(src_l, dst_l, batch_num_nodes, edge_feats, node_feats,
                                    edge_feats_refl, mode='train', joint_acts=joint_acts)
    np.testing.assert_allclose(np.asarray(q_values), np.asarray(q_ref), rtol=5e-2, atol=5e-2)

    inf_values = layer.forward(src_l, dst_l, batch_num_nodes, edge_feats, node_feats,
                               edge_feats_refl, mode='inference', node_probability=node_prob)
    inf_values = jax.block_until_ready(inf_values)
    assert inf_values.shape == (len(batch_num_nodes), num_acts)
    inf_ref = layer.forward_reference(src_l, dst_l, batch_num_nodes, edge_feats, node_feats,
                                      edge_feats_refl, mode='inference',
                                      node_probability=node_prob)
    np.testing.assert_allclose(np.asarray(inf_values), np.asarray(inf_ref), rtol=5e-2, atol=5e-2)

    # ---- case 2: tiny graph routed around Pallas (fixed-cost threshold) ----
    src_s, dst_s, bnn_s = _build_complete_graph_batch(2, 3)               # N=6, E=12
    Ns, Es = sum(bnn_s), len(src_s)
    kk = jax.random.split(jax.random.PRNGKey(1), 3)
    nf_s = jax.random.normal(kk[0], (Ns, 2 * dim_in_node), jnp.float32)
    ef_s = jax.random.normal(kk[1], (Es, 3 * dim_in_node), jnp.float32)
    er_s = jax.random.normal(kk[2], (Es, 3 * dim_in_node), jnp.float32)
    ja_s = [0, 1, 2, 3, 0, 1]
    q_small = layer.forward(src_s, dst_s, bnn_s, ef_s, nf_s, er_s,
                            mode='train', joint_acts=ja_s)
    q_small = jax.block_until_ready(q_small)
    q_small_ref = layer.forward_reference(src_s, dst_s, bnn_s, ef_s, nf_s, er_s,
                                          mode='train', joint_acts=ja_s)
    np.testing.assert_allclose(np.asarray(q_small), np.asarray(q_small_ref),
                               rtol=5e-2, atol=5e-2)
    assert q_small.shape == (len(bnn_s), 1)

    print("KERNEL_OK")
</pallas_src>

<mosaic_0001>
module attributes {stable_mosaic.version = 11 : i64} {
  func.func @_node_mlp_kernel(%arg0: i32, %arg1: memref<256x16xbf16, #tpu.memory_space<vmem>>, %arg2: memref<16x32xbf16, #tpu.memory_space<vmem>>, %arg3: memref<1x32xf32, #tpu.memory_space<vmem>>, %arg4: memref<32x32xbf16, #tpu.memory_space<vmem>>, %arg5: memref<1x32xf32, #tpu.memory_space<vmem>>, %arg6: memref<32x4xbf16, #tpu.memory_space<vmem>>, %arg7: memref<1x4xf32, #tpu.memory_space<vmem>>, %arg8: memref<256x4xf32, #tpu.memory_space<vmem>>) attributes {dimension_semantics = [#tpu.dimension_semantics<parallel>], iteration_bounds = array<i64: 2>, scalar_prefetch = 0 : i64, scratch_operands = 0 : i64, tpu.core_type = #tpu.core_type<tc>, window_params = [{transform_indices = @transform_0, window_bounds = array<i64: 256, 16>}, {pipeline_mode = #tpu.pipeline_mode<synchronous>, transform_indices = @transform_1, window_bounds = array<i64: 16, 32>}, {pipeline_mode = #tpu.pipeline_mode<synchronous>, transform_indices = @transform_2, window_bounds = array<i64: 1, 32>}, {pipeline_mode = #tpu.pipeline_mode<synchronous>, transform_indices = @transform_3, window_bounds = array<i64: 32, 32>}, {pipeline_mode = #tpu.pipeline_mode<synchronous>, transform_indices = @transform_4, window_bounds = array<i64: 1, 32>}, {pipeline_mode = #tpu.pipeline_mode<synchronous>, transform_indices = @transform_5, window_bounds = array<i64: 32, 4>}, {pipeline_mode = #tpu.pipeline_mode<synchronous>, transform_indices = @transform_6, window_bounds = array<i64: 1, 4>}, {transform_indices = @transform_7, window_bounds = array<i64: 256, 4>}]} {
    %c0 = arith.constant 0 : index
    %c0_0 = arith.constant 0 : index
    %0 = vector.load %arg1[%c0, %c0_0] : memref<256x16xbf16, #tpu.memory_space<vmem>>, vector<256x16xbf16>
    %c0_1 = arith.constant 0 : index
    %c0_2 = arith.constant 0 : index
    %1 = vector.load %arg2[%c0_1, %c0_2] : memref<16x32xbf16, #tpu.memory_space<vmem>>, vector<16x32xbf16>
    %cst = arith.constant dense<0.000000e+00> : vector<256x32xf32>
    %2 = tpu.matmul %0, %1, %cst {dimension_numbers = #tpu.dot_dimension_numbers<[1], [0], [0], [1], [0, 0, 1, 1], [], []>} : vector<256x16xbf16>, vector<16x32xbf16>, vector<256x32xf32> -> vector<256x32xf32>
    %c0_3 = arith.constant 0 : index
    %c0_4 = arith.constant 0 : index
    %3 = vector.load %arg3[%c0_3, %c0_4] : memref<1x32xf32, #tpu.memory_space<vmem>>, vector<1x32xf32>
    %4 = vector.broadcast %3 : vector<1x32xf32> to vector<256x32xf32>
    %5 = arith.addf %2, %4 : vector<256x32xf32>
    %cst_5 = arith.constant 0.000000e+00 : f32
    %6 = vector.broadcast %cst_5 : f32 to vector<256x32xf32>
    %7 = arith.maximumf %5, %6 : vector<256x32xf32>
    %8 = arith.truncf %7 : vector<256x32xf32> to vector<256x32xbf16>
    %c0_6 = arith.constant 0 : index
    %c0_7 = arith.constant 0 : index
    %9 = vector.load %arg4[%c0_6, %c0_7] : memref<32x32xbf16, #tpu.memory_space<vmem>>, vector<32x32xbf16>
    %cst_8 = arith.constant dense<0.000000e+00> : vector<256x32xf32>
    %10 = tpu.matmul %8, %9, %cst_8 {dimension_numbers = #tpu.dot_dimension_numbers<[1], [0], [0], [1], [0, 0, 1, 1], [], []>} : vector<256x32xbf16>, vector<32x32xbf16>, vector<256x32xf32> -> vector<256x32xf32>
    %c0_9 = arith.constant 0 : index
    %c0_10 = arith.constant 0 : index
    %11 = vector.load %arg5[%c0_9, %c0_10] : memref<1x32xf32, #tpu.memory_space<vmem>>, vector<1x32xf32>
    %12 = vector.broadcast %11 : vector<1x32xf32> to vector<256x32xf32>
    %13 = arith.addf %10, %12 : vector<256x32xf32>
    %cst_11 = arith.constant 0.000000e+00 : f32
    %14 = vector.broadcast %cst_11 : f32 to vector<256x32xf32>
    %15 = arith.maximumf %13, %14 : vector<256x32xf32>
    %16 = arith.truncf %15 : vector<256x32xf32> to vector<256x32xbf16>
    %c0_12 = arith.constant 0 : index
    %c0_13 = arith.constant 0 : index
    %17 = vector.load %arg6[%c0_12, %c0_13] : memref<32x4xbf16, #tpu.memory_space<vmem>>, vector<32x4xbf16>
    %cst_14 = arith.constant dense<0.000000e+00> : vector<256x4xf32>
    %18 = tpu.matmul %16, %17, %cst_14 {dimension_numbers = #tpu.dot_dimension_numbers<[1], [0], [0], [1], [0, 0, 1, 1], [], []>} : vector<256x32xbf16>, vector<32x4xbf16>, vector<256x4xf32> -> vector<256x4xf32>
    %c0_15 = arith.constant 0 : index
    %c0_16 = arith.constant 0 : index
    %19 = vector.load %arg7[%c0_15, %c0_16] : memref<1x4xf32, #tpu.memory_space<vmem>>, vector<1x4xf32>
    %20 = vector.broadcast %19 : vector<1x4xf32> to vector<256x4xf32>
    %21 = arith.addf %18, %20 : vector<256x4xf32>
    %c0_17 = arith.constant 0 : index
    %c0_18 = arith.constant 0 : index
    %22 = vector.load %arg8[%c0_17, %c0_18] : memref<256x4xf32, #tpu.memory_space<vmem>>, vector<256x4xf32>
    tpu.vector_store %arg8[%c0_17, %c0_18], %21 {strides = array<i32>} : memref<256x4xf32, #tpu.memory_space<vmem>>, vector<256x4xf32>,
    return
  }
  func.func @transform_0(%arg0: i32) -> (i32, i32) {
    %c0_i32 = arith.constant 0 : i32
    %c0_i32_0 = arith.constant 0 : i32
    return %arg0, %c0_i32 : i32, i32
  }
  func.func @transform_1(%arg0: i32) -> (i32, i32) {
    %c0_i32 = arith.constant 0 : i32
    %c0_i32_0 = arith.constant 0 : i32
    %c0_i32_1 = arith.constant 0 : i32
    return %c0_i32, %c0_i32_0 : i32, i32
  }
  func.func @transform_2(%arg0: i32) -> (i32, i32) {
    %c0_i32 = arith.constant 0 : i32
    %c0_i32_0 = arith.constant 0 : i32
    %c0_i32_1 = arith.constant 0 : i32
    return %c0_i32, %c0_i32_0 : i32, i32
  }
  func.func @transform_3(%arg0: i32) -> (i32, i32) {
    %c0_i32 = arith.constant 0 : i32
    %c0_i32_0 = arith.constant 0 : i32
    %c0_i32_1 = arith.constant 0 : i32
    return %c0_i32, %c0_i32_0 : i32, i32
  }
  func.func @transform_4(%arg0: i32) -> (i32, i32) {
    %c0_i32 = arith.constant 0 : i32
    %c0_i32_0 = arith.constant 0 : i32
    %c0_i32_1 = arith.constant 0 : i32
    return %c0_i32, %c0_i32_0 : i32, i32
  }
  func.func @transform_5(%arg0: i32) -> (i32, i32) {
    %c0_i32 = arith.constant 0 : i32
    %c0_i32_0 = arith.constant 0 : i32
    %c0_i32_1 = arith.constant 0 : i32
    return %c0_i32, %c0_i32_0 : i32, i32
  }
  func.func @transform_6(%arg0: i32) -> (i32, i32) {
    %c0_i32 = arith.constant 0 : i32
    %c0_i32_0 = arith.constant 0 : i32
    %c0_i32_1 = arith.constant 0 : i32
    return %c0_i32, %c0_i32_0 : i32, i32
  }
  func.func @transform_7(%arg0: i32) -> (i32, i32) {
    %c0_i32 = arith.constant 0 : i32
    %c0_i32_0 = arith.constant 0 : i32
    return %arg0, %c0_i32 : i32, i32
  }
}

</mosaic_0001>

<llo_original>
// kernel: tpu_custom_call.1
$region0: #{tpu_custom_call.1}
  #allocation0 [shape = 'u32[]', space=smem, size = 0x4, offset = 0x4, fixed_abs, tag = 'smem constant byte address 0x4 - core index']
  #allocation1 [shape = 'u32[144,128]{1,0:T(1,128)}', space=vmem, size = 0x12000, scoped, tag = 'internal scratch']
  %s0 = inlined_call_operand.vmem [shape: bf16[512,16], index: 0, kind: input, shape index: {}]
  %s1 = inlined_call_operand.vmem [shape: bf16[16,32], index: 1, kind: input, shape index: {}]
  %s2 = inlined_call_operand.vmem [shape: f32[1,32], index: 2, kind: input, shape index: {}]
  %s3 = inlined_call_operand.vmem [shape: bf16[32,32], index: 3, kind: input, shape index: {}]
  %s4 = inlined_call_operand.vmem [shape: f32[1,32], index: 4, kind: input, shape index: {}]
  %s5 = inlined_call_operand.vmem [shape: bf16[32,4], index: 5, kind: input, shape index: {}]
  %s6 = inlined_call_operand.vmem [shape: f32[1,4], index: 6, kind: input, shape index: {}]
  %s7 = inlined_call_operand.vmem [shape: f32[512,4], index: 7, kind: output, shape index: {}]
  %s8 = sld [smem:[#allocation0]]
  $region61: #{tpu_custom_call.1} parent=0
    _
  %s10 = ssub.s32 1, %s8
  %s11 = scalar_select 0, %s10, %s8
  loop: start=0, step=1, limit=4
  $region2: #{tpu_custom_call.1} parent=0 // loop_pre_header
    _
  $region3: #{tpu_custom_call.1} parent=0 // loop_header
    %s13 = sphi 0, %s17
    %p14 = scmp.ge.s32.totalorder %s13, 4
    %s23 = sphi 0, %s25
    %s26 = sphi 0, %s23
    %s27 = sphi 0, %s26
    %s43 = sphi 0, %s27
    %s47 = sphi 0, %s47
    %s49 = sphi 0, %s47
    %s50 = sphi 0, %s49
    %s64 = sphi 0, %s50
    %s68 = sphi 0, %s68
    %s70 = sphi 0, %s68
    %s71 = sphi 0, %s70
    %s85 = sphi 0, %s71
    %s89 = sphi 0, %s89
    %s91 = sphi 0, %s89
    %s92 = sphi 0, %s91
    %s106 = sphi 0, %s92
    %s110 = sphi 0, %s110
    %s112 = sphi 0, %s110
    %s113 = sphi 0, %s112
    %s127 = sphi 0, %s113
    %s131 = sphi 0, %s131
    %s133 = sphi 0, %s131
    %s134 = sphi 0, %s133
    %s148 = sphi 0, %s134
    %s152 = sphi 0, %s152
    %s154 = sphi 0, %s152
    %s155 = sphi 0, %s154
    %s169 = sphi 0, %s155
    %s175 = sphi 0, %s177
    %s178 = sphi 0, %s175
    %s179 = sphi 0, %s178
    %s195 = sphi 0, %s179
  $region4: #{tpu_custom_call.1} parent=0 // loop_header_branch
    %16 = sbr.rel (%p14) target = $region8
  $region5: #{tpu_custom_call.1} parent=0 // loop_body
    %s18 = ssub.s32 %s13, 1
    %s19 = ssub.s32 %s13, 2
    %s20 = sadd.s32 %s13, 1
    %s21 = ssub.s32 %s13, %s20
    %p22 = scmp.eq.s32.totalorder %s21, 0
    %s24 = sadd.s32 %s23, 1
    %s25 = scalar_select %p22, %s23, %s24
    %p28 = pneg %p22
    %p29 = scmp.eq.s32.totalorder %s13, 1
    %p30 = por %p28, %p29
    %p31 = scmp.ne.s32.totalorder %s23, %s26
    %p32 = scmp.eq.s32.totalorder %s13, 0
    %p33 = por %p31, %p32
    %p34 = scmp.ne.s32.totalorder %s23, %s26
    %p35 = scmp.eq.s32.totalorder %s18, 1
    %p36 = por %p34, %p35
    %p37 = scmp.ne.s32.totalorder %s26, %s27
    %p38 = scmp.eq.s32.totalorder %s18, 0
    %p39 = por %p37, %p38
    %p40 = scmp.ne.s32.totalorder %s26, %s27
    %p41 = scmp.eq.s32.totalorder %s19, 1
    %p42 = por %p40, %p41
    %p44 = scmp.ne.s32.totalorder %s27, %s43
    %p45 = scmp.eq.s32.totalorder %s19, 0
    %p46 = por %p44, %p45
    %s48 = sadd.s32 %s47, 1
    %p51 = scmp.eq.s32.totalorder %s13, 1
    %p52 = scmp.ne.s32.totalorder %s47, %s49
    %p53 = scmp.eq.s32.totalorder %s13, 0
    %p54 = por %p52, %p53
    %p55 = scmp.ne.s32.totalorder %s47, %s49
    %p56 = scmp.eq.s32.totalorder %s18, 1
    %p57 = por %p55, %p56
    %p58 = scmp.ne.s32.totalorder %s49, %s50
    %p59 = scmp.eq.s32.totalorder %s18, 0
    %p60 = por %p58, %p59
    %p61 = scmp.ne.s32.totalorder %s49, %s50
    %p62 = scmp.eq.s32.totalorder %s19, 1
    %p63 = por %p61, %p62
    %p65 = scmp.ne.s32.totalorder %s50, %s64
    %p66 = scmp.eq.s32.totalorder %s19, 0
    %p67 = por %p65, %p66
    %s69 = sadd.s32 %s68, 1
    %p72 = scmp.eq.s32.totalorder %s13, 1
    %p73 = scmp.ne.s32.totalorder %s68, %s70
    %p74 = scmp.eq.s32.totalorder %s13, 0
    %p75 = por %p73, %p74
    %p76 = scmp.ne.s32.totalorder %s68, %s70
    %p77 = scmp.eq.s32.totalorder %s18, 1
    %p78 = por %p76, %p77
    %p79 = scmp.ne.s32.totalorder %s70, %s71
    %p80 = scmp.eq.s32.totalorder %s18, 0
    %p81 = por %p79, %p80
    %p82 = scmp.ne.s32.totalorder %s70, %s71
    %p83 = scmp.eq.s32.totalorder %s19, 1
    %p84 = por %p82, %p83
    %p86 = scmp.ne.s32.totalorder %s71, %s85
    %p87 = scmp.eq.s32.totalorder %s19, 0
    %p88 = por %p86, %p87
    %s90 = sadd.s32 %s89, 1
    %p93 = scmp.eq.s32.totalorder %s13, 1
    %p94 = scmp.ne.s32.totalorder %s89, %s91
    %p95 = scmp.eq.s32.totalorder %s13, 0
    %p96 = por %p94, %p95
    %p97 = scmp.ne.s32.totalorder %s89, %s91
    %p98 = scmp.eq.s32.totalorder %s18, 1
    %p99 = por %p97, %p98
    %p100 = scmp.ne.s32.totalorder %s91, %s92
    %p101 = scmp.eq.s32.totalorder %s18, 0
    %p102 = por %p100, %p101
    %p103 = scmp.ne.s32.totalorder %s91, %s92
    %p104 = scmp.eq.s32.totalorder %s19, 1
    %p105 = por %p103, %p104
    %p107 = scmp.ne.s32.totalorder %s92, %s106
    %p108 = scmp.eq.s32.totalorder %s19, 0
    %p109 = por %p107, %p108
    %s111 = sadd.s32 %s110, 1
    %p114 = scmp.eq.s32.totalorder %s13, 1
    %p115 = scmp.ne.s32.totalorder %s110, %s112
    %p116 = scmp.eq.s32.totalorder %s13, 0
    %p117 = por %p115, %p116
    %p118 = scmp.ne.s32.totalorder %s110, %s112
    %p119 = scmp.eq.s32.totalorder %s18, 1
    %p120 = por %p118, %p119
    %p121 = scmp.ne.s32.totalorder %s112, %s113
    %p122 = scmp.eq.s32.totalorder %s18, 0
    %p123 = por %p121, %p122
    %p124 = scmp.ne.s32.totalorder %s112, %s113
    %p125 = scmp.eq.s32.totalorder %s19, 1
    %p126 = por %p124, %p125
    %p128 = scmp.ne.s32.totalorder %s113, %s127
    %p129 = scmp.eq.s32.totalorder %s19, 0
    %p130 = por %p128, %p129
    %s132 = sadd.s32 %s131, 1
    %p135 = scmp.eq.s32.totalorder %s13, 1
    %p136 = scmp.ne.s32.totalorder %s131, %s133
    %p137 = scmp.eq.s32.totalorder %s13, 0
    %p138 = por %p136, %p137
    %p139 = scmp.ne.s32.totalorder %s131, %s133
    %p140 = scmp.eq.s32.totalorder %s18, 1
    %p141 = por %p139, %p140
    %p142 = scmp.ne.s32.totalorder %s133, %s134
    %p143 = scmp.eq.s32.totalorder %s18, 0
    %p144 = por %p142, %p143
    %p145 = scmp.ne.s32.totalorder %s133, %s134
    %p146 = scmp.eq.s32.totalorder %s19, 1
    %p147 = por %p145, %p146
    %p149 = scmp.ne.s32.totalorder %s134, %s148
    %p150 = scmp.eq.s32.totalorder %s19, 0
    %p151 = por %p149, %p150
    %s153 = sadd.s32 %s152, 1
    %p156 = scmp.eq.s32.totalorder %s13, 1
    %p157 = scmp.ne.s32.totalorder %s152, %s154
    %p158 = scmp.eq.s32.totalorder %s13, 0
    %p159 = por %p157, %p158
    %p160 = scmp.ne.s32.totalorder %s152, %s154
    %p161 = scmp.eq.s32.totalorder %s18, 1
    %p162 = por %p160, %p161
    %p163 = scmp.ne.s32.totalorder %s154, %s155
    %p164 = scmp.eq.s32.totalorder %s18, 0
    %p165 = por %p163, %p164
    %p166 = scmp.ne.s32.totalorder %s154, %s155
    %p167 = scmp.eq.s32.totalorder %s19, 1
    %p168 = por %p166, %p167
    %p170 = scmp.ne.s32.totalorder %s155, %s169
    %p171 = scmp.eq.s32.totalorder %s19, 0
    %p172 = por %p170, %p171
    %s173 = ssub.s32 %s13, %s20
    %p174 = scmp.eq.s32.totalorder %s173, 0
    %s176 = sadd.s32 %s175, 1
    %s177 = scalar_select %p174, %s175, %s176
    %p180 = pneg %p174
    %p181 = scmp.eq.s32.totalorder %s13, 1
    %p182 = por %p180, %p181
    %p183 = scmp.ne.s32.totalorder %s175, %s178
    %p184 = scmp.eq.s32.totalorder %s13, 0
    %p185 = por %p183, %p184
    %p186 = scmp.ne.s32.totalorder %s175, %s178
    %p187 = scmp.eq.s32.totalorder %s18, 1
    %p188 = por %p186, %p187
    %p189 = scmp.ne.s32.totalorder %s178, %s179
    %p190 = scmp.eq.s32.totalorder %s18, 0
    %p191 = por %p189, %p190
    %p192 = scmp.ne.s32.totalorder %s178, %s179
    %p193 = scmp.eq.s32.totalorder %s19, 1
    %p194 = por %p192, %p193
    %p196 = scmp.ne.s32.totalorder %s179, %s195
    %p197 = scmp.eq.s32.totalorder %s19, 0
    %p198 = por %p196, %p197
    %p199 = scmp.le.s32.totalorder 1, %s13
    %p200 = scmp.lt.s32.totalorder %s13, 3
    %p201 = pnand %p199, %p200
    %p202 = pneg %p201
    // Predicated region
    $region9: #{tpu_custom_call.1} parent=5 // pred_check
      _
    $region10: #{tpu_custom_call.1} parent=5 // pred_check_branch
      %204 = sbr.rel (%p201) target = $region12
    $region11: #{tpu_custom_call.1} parent=5 // pred_region
      %s205 = ssub.s32 %s13, 1
      // Predicated region
      $region13: #{tpu_custom_call.1} parent=11 // pred_check
        %p206 = pneg %p60
      $region14: #{tpu_custom_call.1} parent=11 // pred_check_branch
        %208 = sbr.rel (%p206) target = $region16
      $region15: #{tpu_custom_call.1} parent=11 // pred_region
        _
      $region16: #{tpu_custom_call.1} parent=11 // pred_fallthru
        _
      // Predicated region
      $region17: #{tpu_custom_call.1} parent=11 // pred_check
        %p209 = pneg %p81
      $region18: #{tpu_custom_call.1} parent=11 // pred_check_branch
        %211 = sbr.rel (%p209) target = $region20
      $region19: #{tpu_custom_call.1} parent=11 // pred_region
        _
      $region20: #{tpu_custom_call.1} parent=11 // pred_fallthru
        _
      // Predicated region
      $region21: #{tpu_custom_call.1} parent=11 // pred_check
        %p212 = pneg %p102
      $region22: #{tpu_custom_call.1} parent=11 // pred_check_branch
        %214 = sbr.rel (%p212) target = $region24
      $region23: #{tpu_custom_call.1} parent=11 // pred_region
        _
      $region24: #{tpu_custom_call.1} parent=11 // pred_fallthru
        _
      // Predicated region
      $region25: #{tpu_custom_call.1} parent=11 // pred_check
        %p215 = pneg %p123
      $region26: #{tpu_custom_call.1} parent=11 // pred_check_branch
        %217 = sbr.rel (%p215) target = $region28
      $region27: #{tpu_custom_call.1} parent=11 // pred_region
        _
      $region28: #{tpu_custom_call.1} parent=11 // pred_fallthru
        _
      // Predicated region
      $region29: #{tpu_custom_call.1} parent=11 // pred_check
        %p218 = pneg %p144
      $region30: #{tpu_custom_call.1} parent=11 // pred_check_branch
        %220 = sbr.rel (%p218) target = $region32
      $region31: #{tpu_custom_call.1} parent=11 // pred_region
        _
      $region32: #{tpu_custom_call.1} parent=11 // pred_fallthru
        _
      // Predicated region
      $region33: #{tpu_custom_call.1} parent=11 // pred_check
        %p221 = pneg %p165
      $region34: #{tpu_custom_call.1} parent=11 // pred_check_branch
        %223 = sbr.rel (%p221) target = $region36
      $region35: #{tpu_custom_call.1} parent=11 // pred_region
        _
      $region36: #{tpu_custom_call.1} parent=11 // pred_fallthru
        _
    $region12: #{tpu_custom_call.1} parent=5 // pred_fallthru
      _
    %p224 = scmp.lt.s32.totalorder %s13, 2
    // Predicated region
    $region37: #{tpu_custom_call.1} parent=5 // pred_check
      %p225 = pneg %p224
    $region38: #{tpu_custom_call.1} parent=5 // pred_check_branch
      %227 = sbr.rel (%p225) target = $region40
    $region39: #{tpu_custom_call.1} parent=5 // pred_region
      // Predicated region
      $region41: #{tpu_custom_call.1} parent=39 // pred_check
        %p228 = pneg %p33
      $region42: #{tpu_custom_call.1} parent=39 // pred_check_branch
        %230 = sbr.rel (%p228) target = $region44
      $region43: #{tpu_custom_call.1} parent=39 // pred_region
        %s231 = smul.u32 32, %s13
        %p232 = scmp.lt.s32.totalorder %s231, 63
        %s233 = scalar_select %p232, %s231, 63
        %s234 = smul.addr %s233, 4
        %s235 = scalar_lea.vmem %s0, %s234
        %s236 = smul.u32 32, %s13
      $region44: #{tpu_custom_call.1} parent=39 // pred_fallthru
        _
    $region40: #{tpu_custom_call.1} parent=5 // pred_fallthru
      _
    %p237 = scmp.le.s32.totalorder 1, %s13
    %p238 = scmp.lt.s32.totalorder %s13, 3
    %p239 = pnand %p237, %p238
    %p240 = pneg %p239
    // Predicated region
    $region45: #{tpu_custom_call.1} parent=5 // pred_check
      _
    $region46: #{tpu_custom_call.1} parent=5 // pred_check_branch
      %242 = sbr.rel (%p239) target = $region48
    $region47: #{tpu_custom_call.1} parent=5 // pred_region
      %s243 = ssub.s32 %s13, 1
      %s244 = smul.u32 32, %s18
      %p245 = scmp.lt.s32.totalorder %s244, 63
      %s246 = scalar_select %p245, %s244, 63
      %s247 = smul.addr %s246, 4
      %s248 = scalar_lea.vmem %s0, %s247
      %p249 = pneg %p39
      %p250 = pneg %p36
      %p251 = pneg %p60
      %p252 = pneg %p57
      %p253 = pneg %p81
      %p254 = pneg %p78
      %p255 = pneg %p102
      %p256 = pneg %p99
      %p257 = pneg %p123
      %p258 = pneg %p120
      %p259 = pneg %p144
      %p260 = pneg %p141
      %p261 = pneg %p165
      %p262 = pneg %p162
      %p263 = pneg %p191
      %p264 = pneg %p188
      %s265 = smul.u32 32, %s18
      %p266 = scmp.lt.s32.totalorder %s265, 63
      %s267 = scalar_select %p266, %s265, 63
      %s268 = smul.addr %s267, 8
      %s269 = scalar_lea.vmem %s7, %s268
      %s270 = smul.u32 32, %s18
      %p271 = scmp.lt.s32.totalorder %s270, 63
      %s272 = scalar_select %p271, %s270, 63
      %s273 = smul.addr %s272, 4
      %s274 = scalar_lea.vmem %s0, %s273
      %s275 = smul.u32 32, %s18
      %s276 = smul.u32 32, %s18
      %p277 = scmp.lt.s32.totalorder %s276, 63
      %s278 = scalar_select %p277, %s276, 63
      %s279 = smul.addr %s278, 8
      %s280 = scalar_lea.vmem %s7, %s279
      %s281 = smul.u32 32, %s18
      %v283 = vld [vmem:[%s274] sm:$0xf]
      %v284 = vld [vmem:[%s274 + $0x4] sm:$0xf]
      %v285 = vld [vmem:[%s274 + $0x8] sm:$0xf]
      %v286 = vld [vmem:[%s274 + $0xc] sm:$0xf]
      %v287 = vld [vmem:[%s274 + $0x10] sm:$0xf]
      %v288 = vld [vmem:[%s274 + $0x14] sm:$0xf]
      %v289 = vld [vmem:[%s274 + $0x18] sm:$0xf]
      %v290 = vld [vmem:[%s274 + $0x1c] sm:$0xf]
      %v291 = vld [vmem:[%s274 + $0x20] sm:$0xf]
      %v292 = vld [vmem:[%s274 + $0x24] sm:$0xf]
      %v293 = vld [vmem:[%s274 + $0x28] sm:$0xf]
      %v294 = vld [vmem:[%s274 + $0x2c] sm:$0xf]
      %v295 = vld [vmem:[%s274 + $0x30] sm:$0xf]
      %v296 = vld [vmem:[%s274 + $0x34] sm:$0xf]
      %v297 = vld [vmem:[%s274 + $0x38] sm:$0xf]
      %v298 = vld [vmem:[%s274 + $0x3c] sm:$0xf]
      %v299 = vld [vmem:[%s274 + $0x40] sm:$0xf]
      %v300 = vld [vmem:[%s274 + $0x44] sm:$0xf]
      %v301 = vld [vmem:[%s274 + $0x48] sm:$0xf]
      %v302 = vld [vmem:[%s274 + $0x4c] sm:$0xf]
      %v303 = vld [vmem:[%s274 + $0x50] sm:$0xf]
      %v304 = vld [vmem:[%s274 + $0x54] sm:$0xf]
      %v305 = vld [vmem:[%s274 + $0x58] sm:$0xf]
      %v306 = vld [vmem:[%s274 + $0x5c] sm:$0xf]
      %v307 = vld [vmem:[%s274 + $0x60] sm:$0xf]
      %v308 = vld [vmem:[%s274 + $0x64] sm:$0xf]
      %v309 = vld [vmem:[%s274 + $0x68] sm:$0xf]
      %v310 = vld [vmem:[%s274 + $0x6c] sm:$0xf]
      %v311 = vld [vmem:[%s274 + $0x70] sm:$0xf]
      %v312 = vld [vmem:[%s274 + $0x74] sm:$0xf]
      %v313 = vld [vmem:[%s274 + $0x78] sm:$0xf]
      %v314 = vld [vmem:[%s274 + $0x7c] sm:$0xf]
      %v315 = vld [vmem:[%s1] sm:$0xf]
      %v316 = vld [vmem:[%s1 + $0x4] sm:$0xf]
      %v317 = vld [vmem:[%s2] sm:$0x1]
      %v319 = vlaneseq
      %v320 = vshrl.u32 %v319, 7
      %v321 = vsub.s32 0, %v320
      %v322 = vrot.slane %v317, %v321
      %v356 = vunpack.c.l.b16 %v283
      %v357 = vunpack.c.l.b16 %v284
      %v358 = vunpack.c.l.b16 %v285
      %v359 = vunpack.c.l.b16 %v286
      %v360 = vunpack.c.l.b16 %v287
      %v361 = vunpack.c.l.b16 %v288
      %v362 = vunpack.c.l.b16 %v289
      %v363 = vunpack.c.l.b16 %v290
      %v364 = vunpack.c.l.b16 %v291
      %v365 = vunpack.c.l.b16 %v292
      %v366 = vunpack.c.l.b16 %v293
      %v367 = vunpack.c.l.b16 %v294
      %v368 = vunpack.c.l.b16 %v295
      %v369 = vunpack.c.l.b16 %v296
      %v370 = vunpack.c.l.b16 %v297
      %v371 = vunpack.c.l.b16 %v298
      %v372 = vunpack.c.l.b16 %v299
      %v373 = vunpack.c.l.b16 %v300
      %v374 = vunpack.c.l.b16 %v301
      %v375 = vunpack.c.l.b16 %v302
      %v376 = vunpack.c.l.b16 %v303
      %v377 = vunpack.c.l.b16 %v304
      %v378 = vunpack.c.l.b16 %v305
      %v379 = vunpack.c.l.b16 %v306
      %v380 = vunpack.c.l.b16 %v307
      %v381 = vunpack.c.l.b16 %v308
      %v382 = vunpack.c.l.b16 %v309
      %v383 = vunpack.c.l.b16 %v310
      %v384 = vunpack.c.l.b16 %v311
      %v385 = vunpack.c.l.b16 %v312
      %v386 = vunpack.c.l.b16 %v313
      %v387 = vunpack.c.l.b16 %v314
      %v388 = vpack.c.b16 %v357, %v356
      %v389 = vpack.c.b16 %v359, %v358
      %v390 = vpack.c.b16 %v361, %v360
      %v391 = vpack.c.b16 %v363, %v362
      %v392 = vpack.c.b16 %v365, %v364
      %v393 = vpack.c.b16 %v367, %v366
      %v394 = vpack.c.b16 %v369, %v368
      %v395 = vpack.c.b16 %v371, %v370
      %v396 = vpack.c.b16 %v373, %v372
      %v397 = vpack.c.b16 %v375, %v374
      %v398 = vpack.c.b16 %v377, %v376
      %v399 = vpack.c.b16 %v379, %v378
      %v400 = vpack.c.b16 %v381, %v380
      %v401 = vpack.c.b16 %v383, %v382
      %v402 = vpack.c.b16 %v385, %v384
      %v403 = vpack.c.b16 %v387, %v386
      %v406 = vunpack.c.l.b16 %v315
      %v407 = vunpack.c.l.b16 %v316
      %v408 = vpack.c.b16 %v407, %v406
      %vm410 = vcmask 130048
      %v412 = vsel %vm410, %v388, 0
      %v415 = vsel %vm410, %v389, 0
      %v418 = vsel %vm410, %v390, 0
      %v421 = vsel %vm410, %v391, 0
      %v424 = vsel %vm410, %v392, 0
      %v427 = vsel %vm410, %v393, 0
      %v430 = vsel %vm410, %v394, 0
      %v433 = vsel %vm410, %v395, 0
      %v436 = vsel %vm410, %v396, 0
      %v439 = vsel %vm410, %v397, 0
      %v442 = vsel %vm410, %v398, 0
      %v445 = vsel %vm410, %v399, 0
      %v448 = vsel %vm410, %v400, 0
      %v451 = vsel %vm410, %v401, 0
      %v454 = vsel %vm410, %v402, 0
      %v457 = vsel %vm410, %v403, 0
      %459 = vmatprep.subr.bf16.mxu0 0
      %460 = vmatpush1.bf16.msra.mxu0 %v408
      %461 = vmatprep.subr.bf16.mxu0 0
      %462 = vmatpush1.bf16.msra.mxu0 0
      %463 = vmatprep.subr.bf16.mxu0 0
      %464 = vmatpush1.bf16.msra.mxu0 0
      %465 = vmatprep.subr.bf16.mxu0 0
      %466 = vmatpush1.bf16.msra.mxu0 0
      %467 = vmatprep.subr.bf16.mxu0 0
      %468 = vmatpush1.bf16.msra.mxu0 0
      %469 = vmatprep.subr.bf16.mxu0 0
      %470 = vmatpush1.bf16.msra.mxu0 0
      %471 = vmatprep.subr.bf16.mxu0 0
      %472 = vmatpush1.bf16.msra.mxu0 0
      %473 = vmatprep.subr.bf16.mxu0 0
      %474 = vmatpush1.bf16.msra.mxu0 0
      %475 = vmatprep.subr.bf16.mxu0 0
      %476 = vmatpush1.bf16.msra.mxu0 0
      %477 = vmatprep.subr.bf16.mxu0 0
      %478 = vmatpush1.bf16.msra.mxu0 0
      %479 = vmatprep.subr.bf16.mxu0 0
      %480 = vmatpush1.bf16.msra.mxu0 0
      %481 = vmatprep.subr.bf16.mxu0 0
      %482 = vmatpush1.bf16.msra.mxu0 0
      %483 = vmatprep.subr.bf16.mxu0 0
      %484 = vmatpush1.bf16.msra.mxu0 0
      %485 = vmatprep.subr.bf16.mxu0 0
      %486 = vmatpush1.bf16.msra.mxu0 0
      %487 = vmatprep.subr.bf16.mxu0 0
      %488 = vmatpush1.bf16.msra.mxu0 0
      %489 = vmatprep.subr.bf16.mxu0 0
      %490 = vmatpush1.bf16.msra.mxu0 0
      %491 = vmatprep.mubr.bf16.mxu0 0
      %492 = vmatmul.mubr.bf16.gmra.mrb[0].mxu0 %v412
      %v493 = vpop.f32.mrb[0].mxu0
      %v494 = vadd.f32 %v322, %v493
      %v495 = vpop.f32.mrb[0].mxu0
      %v496 = vpop.f32.mrb[0].mxu0
      %v497 = vadd.f32 %v322, %v496
      %v498 = vpop.f32.mrb[0].mxu0
      %499 = vmatprep.mubr.bf16.mxu0 0
      %500 = vmatmul.mubr.bf16.gmra.mrb[0].mxu0 %v415
      %v501 = vpop.f32.mrb[0].mxu0
      %v502 = vadd.f32 %v322, %v501
      %v503 = vpop.f32.mrb[0].mxu0
      %v504 = vpop.f32.mrb[0].mxu0
      %v505 = vadd.f32 %v322, %v504
      %v506 = vpop.f32.mrb[0].mxu0
      %507 = vmatprep.mubr.bf16.mxu0 0
      %508 = vmatmul.mubr.bf16.gmra.mrb[0].mxu0 %v418
      %v509 = vpop.f32.mrb[0].mxu0
      %v510 = vadd.f32 %v322, %v509
      %v511 = vpop.f32.mrb[0].mxu0
      %v512 = vpop.f32.mrb[0].mxu0
      %v513 = vadd.f32 %v322, %v512
      %v514 = vpop.f32.mrb[0].mxu0
      %515 = vmatprep.mubr.bf16.mxu0 0
      %516 = vmatmul.mubr.bf16.gmra.mrb[0].mxu0 %v421
      %v517 = vpop.f32.mrb[0].mxu0
      %v518 = vadd.f32 %v322, %v517
      %v519 = vpop.f32.mrb[0].mxu0
      %v520 = vpop.f32.mrb[0].mxu0
      %v521 = vadd.f32 %v322, %v520
      %v522 = vpop.f32.mrb[0].mxu0
      %523 = vmatprep.mubr.bf16.mxu0 0
      %524 = vmatmul.mubr.bf16.gmra.mrb[0].mxu0 %v424
      %v525 = vpop.f32.mrb[0].mxu0
      %v526 = vadd.f32 %v322, %v525
      %v527 = vpop.f32.mrb[0].mxu0
      %v528 = vpop.f32.mrb[0].mxu0
      %v529 = vadd.f32 %v322, %v528
      %v530 = vpop.f32.mrb[0].mxu0
      %531 = vmatprep.mubr.bf16.mxu0 0
      %532 = vmatmul.mubr.bf16.gmra.mrb[0].mxu0 %v427
      %v533 = vpop.f32.mrb[0].mxu0
      %v534 = vadd.f32 %v322, %v533
      %v535 = vpop.f32.mrb[0].mxu0
      %v536 = vpop.f32.mrb[0].mxu0
      %v537 = vadd.f32 %v322, %v536
      %v538 = vpop.f32.mrb[0].mxu0
      %539 = vmatprep.mubr.bf16.mxu0 0
      %540 = vmatmul.mubr.bf16.gmra.mrb[0].mxu0 %v430
      %v541 = vpop.f32.mrb[0].mxu0
      %v542 = vadd.f32 %v322, %v541
      %v543 = vpop.f32.mrb[0].mxu0
      %v544 = vpop.f32.mrb[0].mxu0
      %v545 = vadd.f32 %v322, %v544
      %v546 = vpop.f32.mrb[0].mxu0
      %547 = vmatprep.mubr.bf16.mxu0 0
      %548 = vmatmul.mubr.bf16.gmra.mrb[0].mxu0 %v433
      %v549 = vpop.f32.mrb[0].mxu0
      %v550 = vadd.f32 %v322, %v549
      %v551 = vpop.f32.mrb[0].mxu0
      %v552 = vpop.f32.mrb[0].mxu0
      %v553 = vadd.f32 %v322, %v552
      %v554 = vpop.f32.mrb[0].mxu0
      %555 = vmatprep.mubr.bf16.mxu0 0
      %556 = vmatmul.mubr.bf16.gmra.mrb[0].mxu0 %v436
      %v557 = vpop.f32.mrb[0].mxu0
      %v558 = vadd.f32 %v322, %v557
      %v559 = vpop.f32.mrb[0].mxu0
      %v560 = vpop.f32.mrb[0].mxu0
      %v561 = vadd.f32 %v322, %v560
      %v562 = vpop.f32.mrb[0].mxu0
      %563 = vmatprep.mubr.bf16.mxu0 0
      %564 = vmatmul.mubr.bf16.gmra.mrb[0].mxu0 %v439
      %v565 = vpop.f32.mrb[0].mxu0
      %v566 = vadd.f32 %v322, %v565
      %v567 = vpop.f32.mrb[0].mxu0
      %v568 = vpop.f32.mrb[0].mxu0
      %v569 = vadd.f32 %v322, %v568
      %v570 = vpop.f32.mrb[0].mxu0
      %571 = vmatprep.mubr.bf16.mxu0 0
      %572 = vmatmul.mubr.bf16.gmra.mrb[0].mxu0 %v442
      %v573 = vpop.f32.mrb[0].mxu0
      %v574 = vadd.f32 %v322, %v573
      %v575 = vpop.f32.mrb[0].mxu0
      %v576 = vpop.f32.mrb[0].mxu0
      %v577 = vadd.f32 %v322, %v576
      %v578 = vpop.f32.mrb[0].mxu0
      %579 = vmatprep.mubr.bf16.mxu0 0
      %580 = vmatmul.mubr.bf16.gmra.mrb[0].mxu0 %v445
      %v581 = vpop.f32.mrb[0].mxu0
      %v582 = vadd.f32 %v322, %v581
      %v583 = vpop.f32.mrb[0].mxu0
      %v584 = vpop.f32.mrb[0].mxu0
      %v585 = vadd.f32 %v322, %v584
      %v586 = vpop.f32.mrb[0].mxu0
      %587 = vmatprep.mubr.bf16.mxu0 0
      %588 = vmatmul.mubr.bf16.gmra.mrb[0].mxu0 %v448
      %v589 = vpop.f32.mrb[0].mxu0
      %v590 = vadd.f32 %v322, %v589
      %v591 = vpop.f32.mrb[0].mxu0
      %v592 = vpop.f32.mrb[0].mxu0
      %v593 = vadd.f32 %v322, %v592
      %v594 = vpop.f32.mrb[0].mxu0
      %595 = vmatprep.mubr.bf16.mxu0 0
      %596 = vmatmul.mubr.bf16.gmra.mrb[0].mxu0 %v451
      %v597 = vpop.f32.mrb[0].mxu0
      %v598 = vadd.f32 %v322, %v597
      %v599 = vpop.f32.mrb[0].mxu0
      %v600 = vpop.f32.mrb[0].mxu0
      %v601 = vadd.f32 %v322, %v600
      %v602 = vpop.f32.mrb[0].mxu0
      %603 = vmatprep.mubr.bf16.mxu0 0
      %604 = vmatmul.mubr.bf16.gmra.mrb[0].mxu0 %v454
      %v605 = vpop.f32.mrb[0].mxu0
      %v606 = vadd.f32 %v322, %v605
      %v607 = vpop.f32.mrb[0].mxu0
      %v608 = vpop.f32.mrb[0].mxu0
      %v609 = vadd.f32 %v322, %v608
      %v610 = vpop.f32.mrb[0].mxu0
      %611 = vmatprep.mubr.bf16.mxu0 0
      %612 = vmatmul.mubr.bf16.gmra.mrb[0].mxu0 %v457
      %v613 = vpop.f32.mrb[0].mxu0
      %v614 = vadd.f32 %v322, %v613
      %v615 = vpop.f32.mrb[0].mxu0
      %v616 = vpop.f32.mrb[0].mxu0
      %v617 = vadd.f32 %v322, %v616
      %v618 = vpop.f32.mrb[0].mxu0
      %619 = vdwg.mxu0
      %v620 = vmax.f32 %v494, 0.0
      %v621 = vmax.f32 %v497, 0.0
      %v622 = vmax.f32 %v502, 0.0
      %v623 = vmax.f32 %v505, 0.0
      %v624 = vmax.f32 %v510, 0.0
      %v625 = vmax.f32 %v513, 0.0
      %v626 = vmax.f32 %v518, 0.0
      %v627 = vmax.f32 %v521, 0.0
      %v628 = vmax.f32 %v526, 0.0
      %v629 = vmax.f32 %v529, 0.0
      %v630 = vmax.f32 %v534, 0.0
      %v631 = vmax.f32 %v537, 0.0
      %v632 = vmax.f32 %v542, 0.0
      %v633 = vmax.f32 %v545, 0.0
      %v634 = vmax.f32 %v550, 0.0
      %v635 = vmax.f32 %v553, 0.0
      %v636 = vmax.f32 %v558, 0.0
      %v637 = vmax.f32 %v561, 0.0
      %v638 = vmax.f32 %v566, 0.0
      %v639 = vmax.f32 %v569, 0.0
      %v640 = vmax.f32 %v574, 0.0
      %v641 = vmax.f32 %v577, 0.0
      %v642 = vmax.f32 %v582, 0.0
      %v643 = vmax.f32 %v585, 0.0
      %v644 = vmax.f32 %v590, 0.0
      %v645 = vmax.f32 %v593, 0.0
      %v646 = vmax.f32 %v598, 0.0
      %v647 = vmax.f32 %v601, 0.0
      %v648 = vmax.f32 %v606, 0.0
      %v649 = vmax.f32 %v609, 0.0
      %v650 = vmax.f32 %v614, 0.0
      %v651 = vmax.f32 %v617, 0.0
      %v652 = vpack.c.bf16 %v621, %v620
      %v653 = vpack.c.bf16 %v623, %v622
      %v654 = vpack.c.bf16 %v625, %v624
      %v655 = vpack.c.bf16 %v627, %v626
      %v656 = vpack.c.bf16 %v629, %v628
      %v657 = vpack.c.bf16 %v631, %v630
      %v658 = vpack.c.bf16 %v633, %v632
      %v659 = vpack.c.bf16 %v635, %v634
      %v660 = vpack.c.bf16 %v637, %v636
      %v661 = vpack.c.bf16 %v639, %v638
      %v662 = vpack.c.bf16 %v641, %v640
      %v663 = vpack.c.bf16 %v643, %v642
      %v664 = vpack.c.bf16 %v645, %v644
      %v665 = vpack.c.bf16 %v647, %v646
      %v666 = vpack.c.bf16 %v649, %v648
      %v667 = vpack.c.bf16 %v651, %v650
      %v668 = vld [vmem:[%s3] sm:$0xf]
      %v669 = vld [vmem:[%s3 + $0x4] sm:$0xf]
      %v670 = vld [vmem:[%s3 + $0x8] sm:$0xf]
      %v671 = vld [vmem:[%s3 + $0xc] sm:$0xf]
      %v672 = vld [vmem:[%s4] sm:$0x1]
      %v674 = vlaneseq
      %v675 = vshrl.u32 %v674, 7
      %v676 = vsub.s32 0, %v675
      %v677 = vrot.slane %v672, %v676
      %v683 = vunpack.c.l.b16 %v668
      %v684 = vunpack.c.l.b16 %v669
      %v685 = vunpack.c.l.b16 %v670
      %v686 = vunpack.c.l.b16 %v671
      %v687 = vpack.c.b16 %v684, %v683
      %v688 = vpack.c.b16 %v686, %v685
      %vm691 = vcmask 261120
      %v693 = vsel %vm691, %v652, 0
      %v696 = vsel %vm691, %v653, 0
      %v699 = vsel %vm691, %v654, 0
      %v702 = vsel %vm691, %v655, 0
      %v705 = vsel %vm691, %v656, 0
      %v708 = vsel %vm691, %v657, 0
      %v711 = vsel %vm691, %v658, 0
      %v714 = vsel %vm691, %v659, 0
      %v717 = vsel %vm691, %v660, 0
      %v720 = vsel %vm691, %v661, 0
      %v723 = vsel %vm691, %v662, 0
      %v726 = vsel %vm691, %v663, 0
      %v729 = vsel %vm691, %v664, 0
      %v732 = vsel %vm691, %v665, 0
      %v735 = vsel %vm691, %v666, 0
      %v738 = vsel %vm691, %v667, 0
      %740 = vmatprep.subr.bf16.mxu0 0
      %741 = vmatpush1.bf16.msra.mxu0 %v687
      %742 = vmatprep.subr.bf16.mxu0 0
      %743 = vmatpush1.bf16.msra.mxu0 %v688
      %744 = vmatprep.subr.bf16.mxu0 0
      %745 = vmatpush1.bf16.msra.mxu0 0
      %746 = vmatprep.subr.bf16.mxu0 0
      %747 = vmatpush1.bf16.msra.mxu0 0
      %748 = vmatprep.subr.bf16.mxu0 0
      %749 = vmatpush1.bf16.msra.mxu0 0
      %750 = vmatprep.subr.bf16.mxu0 0
      %751 = vmatpush1.bf16.msra.mxu0 0
      %752 = vmatprep.subr.bf16.mxu0 0
      %753 = vmatpush1.bf16.msra.mxu0 0
      %754 = vmatprep.subr.bf16.mxu0 0
      %755 = vmatpush1.bf16.msra.mxu0 0
      %756 = vmatprep.subr.bf16.mxu0 0
      %757 = vmatpush1.bf16.msra.mxu0 0
      %758 = vmatprep.subr.bf16.mxu0 0
      %759 = vmatpush1.bf16.msra.mxu0 0
      %760 = vmatprep.subr.bf16.mxu0 0
      %761 = vmatpush1.bf16.msra.mxu0 0
      %762 = vmatprep.subr.bf16.mxu0 0
      %763 = vmatpush1.bf16.msra.mxu0 0
      %764 = vmatprep.subr.bf16.mxu0 0
      %765 = vmatpush1.bf16.msra.mxu0 0
      %766 = vmatprep.subr.bf16.mxu0 0
      %767 = vmatpush1.bf16.msra.mxu0 0
      %768 = vmatprep.subr.bf16.mxu0 0
      %769 = vmatpush1.bf16.msra.mxu0 0
      %770 = vmatprep.subr.bf16.mxu0 0
      %771 = vmatpush1.bf16.msra.mxu0 0
      %772 = vmatprep.mubr.bf16.mxu0 0
      %773 = vmatmul.mubr.bf16.gmra.mrb[0].mxu0 %v693
      %v774 = vpop.f32.mrb[0].mxu0
      %v775 = vadd.f32 %v677, %v774
      %v776 = vpop.f32.mrb[0].mxu0
      %v777 = vpop.f32.mrb[0].mxu0
      %v778 = vadd.f32 %v677, %v777
      %v779 = vpop.f32.mrb[0].mxu0
      %780 = vmatprep.mubr.bf16.mxu0 0
      %781 = vmatmul.mubr.bf16.gmra.mrb[0].mxu0 %v696
      %v782 = vpop.f32.mrb[0].mxu0
      %v783 = vadd.f32 %v677, %v782
      %v784 = vpop.f32.mrb[0].mxu0
      %v785 = vpop.f32.mrb[0].mxu0
      %v786 = vadd.f32 %v677, %v785
      %v787 = vpop.f32.mrb[0].mxu0
      %788 = vmatprep.mubr.bf16.mxu0 0
      %789 = vmatmul.mubr.bf16.gmra.mrb[0].mxu0 %v699
      %v790 = vpop.f32.mrb[0].mxu0
      %v791 = vadd.f32 %v677, %v790
      %v792 = vpop.f32.mrb[0].mxu0
      %v793 = vpop.f32.mrb[0].mxu0
      %v794 = vadd.f32 %v677, %v793
      %v795 = vpop.f32.mrb[0].mxu0
      %796 = vmatprep.mubr.bf16.mxu0 0
      %797 = vmatmul.mubr.bf16.gmra.mrb[0].mxu0 %v702
      %v798 = vpop.f32.mrb[0].mxu0
      %v799 = vadd.f32 %v677, %v798
      %v800 = vpop.f32.mrb[0].mxu0
      %v801 = vpop.f32.mrb[0].mxu0
      %v802 = vadd.f32 %v677, %v801
      %v803 = vpop.f32.mrb[0].mxu0
      %804 = vmatprep.mubr.bf16.mxu0 0
      %805 = vmatmul.mubr.bf16.gmra.mrb[0].mxu0 %v705
      %v806 = vpop.f32.mrb[0].mxu0
      %v807 = vadd.f32 %v677, %v806
      %v808 = vpop.f32.mrb[0].mxu0
      %v809 = vpop.f32.mrb[0].mxu0
      %v810 = vadd.f32 %v677, %v809
      %v811 = vpop.f32.mrb[0].mxu0
      %812 = vmatprep.mubr.bf16.mxu0 0
      %813 = vmatmul.mubr.bf16.gmra.mrb[0].mxu0 %v708
      %v814 = vpop.f32.mrb[0].mxu0
      %v815 = vadd.f32 %v677, %v814
      %v816 = vpop.f32.mrb[0].mxu0
      %v817 = vpop.f32.mrb[0].mxu0
      %v818 = vadd.f32 %v677, %v817
      %v819 = vpop.f32.mrb[0].mxu0
      %820 = vmatprep.mubr.bf16.mxu0 0
      %821 = vmatmul.mubr.bf16.gmra.mrb[0].mxu0 %v711
      %v822 = vpop.f32.mrb[0].mxu0
      %v823 = vadd.f32 %v677, %v822
      %v824 = vpop.f32.mrb[0].mxu0
      %v825 = vpop.f32.mrb[0].mxu0
      %v826 = vadd.f32 %v677, %v825
      %v827 = vpop.f32.mrb[0].mxu0
      %828 = vmatprep.mubr.bf16.mxu0 0
      %829 = vmatmul.mubr.bf16.gmra.mrb[0].mxu0 %v714
      %v830 = vpop.f32.mrb[0].mxu0
      %v831 = vadd.f32 %v677, %v830
      %v832 = vpop.f32.mrb[0].mxu0
      %v833 = vpop.f32.mrb[0].mxu0
      %v834 = vadd.f32 %v677, %v833
      %v835 = vpop.f32.mrb[0].mxu0
      %836 = vmatprep.mubr.bf16.mxu0 0
      %837 = vmatmul.mubr.bf16.gmra.mrb[0].mxu0 %v717
      %v838 = vpop.f32.mrb[0].mxu0
      %v839 = vadd.f32 %v677, %v838
      %v840 = vpop.f32.mrb[0].mxu0
      %v841 = vpop.f32.mrb[0].mxu0
      %v842 = vadd.f32 %v677, %v841
      %v843 = vpop.f32.mrb[0].mxu0
      %844 = vmatprep.mubr.bf16.mxu0 0
      %845 = vmatmul.mubr.bf16.gmra.mrb[0].mxu0 %v720
      %v846 = vpop.f32.mrb[0].mxu0
      %v847 = vadd.f32 %v677, %v846
      %v848 = vpop.f32.mrb[0].mxu0
      %v849 = vpop.f32.mrb[0].mxu0
      %v850 = vadd.f32 %v677, %v849
      %v851 = vpop.f32.mrb[0].mxu0
      %852 = vmatprep.mubr.bf16.mxu0 0
      %853 = vmatmul.mubr.bf16.gmra.mrb[0].mxu0 %v723
      %v854 = vpop.f32.mrb[0].mxu0
      %v855 = vadd.f32 %v677, %v854
      %v856 = vpop.f32.mrb[0].mxu0
      %v857 = vpop.f32.mrb[0].mxu0
      %v858 = vadd.f32 %v677, %v857
      %v859 = vpop.f32.mrb[0].mxu0
      %860 = vmatprep.mubr.bf16.mxu0 0
      %861 = vmatmul.mubr.bf16.gmra.mrb[0].mxu0 %v726
      %v862 = vpop.f32.mrb[0].mxu0
      %v863 = vadd.f32 %v677, %v862
      %v864 = vpop.f32.mrb[0].mxu0
      %v865 = vpop.f32.mrb[0].mxu0
      %v866 = vadd.f32 %v677, %v865
      %v867 = vpop.f32.mrb[0].mxu0
      %868 = vmatprep.mubr.bf16.mxu0 0
      %869 = vmatmul.mubr.bf16.gmra.mrb[0].mxu0 %v729
      %v870 = vpop.f32.mrb[0].mxu0
      %v871 = vadd.f32 %v677, %v870
      %v872 = vpop.f32.mrb[0].mxu0
      %v873 = vpop.f32.mrb[0].mxu0
      %v874 = vadd.f32 %v677, %v873
      %v875 = vpop.f32.mrb[0].mxu0
      %876 = vmatprep.mubr.bf16.mxu0 0
      %877 = vmatmul.mubr.bf16.gmra.mrb[0].mxu0 %v732
      %v878 = vpop.f32.mrb[0].mxu0
      %v879 = vadd.f32 %v677, %v878
      %v880 = vpop.f32.mrb[0].mxu0
      %v881 = vpop.f32.mrb[0].mxu0
      %v882 = vadd.f32 %v677, %v881
      %v883 = vpop.f32.mrb[0].mxu0
      %884 = vmatprep.mubr.bf16.mxu0 0
      %885 = vmatmul.mubr.bf16.gmra.mrb[0].mxu0 %v735
      %v886 = vpop.f32.mrb[0].mxu0
      %v887 = vadd.f32 %v677, %v886
      %v888 = vpop.f32.mrb[0].mxu0
      %v889 = vpop.f32.mrb[0].mxu0
      %v890 = vadd.f32 %v677, %v889
      %v891 = vpop.f32.mrb[0].mxu0
      %892 = vmatprep.mubr.bf16.mxu0 0
      %893 = vmatmul.mubr.bf16.gmra.mrb[0].mxu0 %v738
      %v894 = vpop.f32.mrb[0].mxu0
      %v895 = vadd.f32 %v677, %v894
      %v896 = vpop.f32.mrb[0].mxu0
      %v897 = vpop.f32.mrb[0].mxu0
      %v898 = vadd.f32 %v677, %v897
      %v899 = vpop.f32.mrb[0].mxu0
      %900 = vdwg.mxu0
      %v901 = vmax.f32 %v775, 0.0
      %v902 = vmax.f32 %v778, 0.0
      %v903 = vmax.f32 %v783, 0.0
      %v904 = vmax.f32 %v786, 0.0
      %v905 = vmax.f32 %v791, 0.0
      %v906 = vmax.f32 %v794, 0.0
      %v907 = vmax.f32 %v799, 0.0
      %v908 = vmax.f32 %v802, 0.0
      %v909 = vmax.f32 %v807, 0.0
      %v910 = vmax.f32 %v810, 0.0
      %v911 = vmax.f32 %v815, 0.0
      %v912 = vmax.f32 %v818, 0.0
      %v913 = vmax.f32 %v823, 0.0
      %v914 = vmax.f32 %v826, 0.0
      %v915 = vmax.f32 %v831, 0.0
      %v916 = vmax.f32 %v834, 0.0
      %v917 = vmax.f32 %v839, 0.0
      %v918 = vmax.f32 %v842, 0.0
      %v919 = vmax.f32 %v847, 0.0
      %v920 = vmax.f32 %v850, 0.0
      %v921 = vmax.f32 %v855, 0.0
      %v922 = vmax.f32 %v858, 0.0
      %v923 = vmax.f32 %v863, 0.0
      %v924 = vmax.f32 %v866, 0.0
      %v925 = vmax.f32 %v871, 0.0
      %v926 = vmax.f32 %v874, 0.0
      %v927 = vmax.f32 %v879, 0.0
      %v928 = vmax.f32 %v882, 0.0
      %v929 = vmax.f32 %v887, 0.0
      %v930 = vmax.f32 %v890, 0.0
      %v931 = vmax.f32 %v895, 0.0
      %v932 = vmax.f32 %v898, 0.0
      %v933 = vpack.c.bf16 %v902, %v901
      %v934 = vpack.c.bf16 %v904, %v903
      %v935 = vpack.c.bf16 %v906, %v905
      %v936 = vpack.c.bf16 %v908, %v907
      %v937 = vpack.c.bf16 %v910, %v909
      %v938 = vpack.c.bf16 %v912, %v911
      %v939 = vpack.c.bf16 %v914, %v913
      %v940 = vpack.c.bf16 %v916, %v915
      %v941 = vpack.c.bf16 %v918, %v917
      %v942 = vpack.c.bf16 %v920, %v919
      %v943 = vpack.c.bf16 %v922, %v921
      %v944 = vpack.c.bf16 %v924, %v923
      %v945 = vpack.c.bf16 %v926, %v925
      %v946 = vpack.c.bf16 %v928, %v927
      %v947 = vpack.c.bf16 %v930, %v929
      %v948 = vpack.c.bf16 %v932, %v931
      %v949 = vld [vmem:[%s5] sm:$0xf]
      %v950 = vld [vmem:[%s5 + $0x4] sm:$0xf]
      %v951 = vld [vmem:[%s5 + $0x8] sm:$0xf]
      %v952 = vld [vmem:[%s5 + $0xc] sm:$0xf]
      %v953 = vld [vmem:[%s6] sm:$0x1]
      %v955 = vlaneseq
      %v956 = vshrl.u32 %v955, 7
      %v957 = vsub.s32 0, %v956
      %v958 = vrot.slane %v953, %v957
      %v964 = vunpack.c.l.b16 %v949
      %v965 = vunpack.c.l.b16 %v950
      %v966 = vunpack.c.l.b16 %v951
      %v967 = vunpack.c.l.b16 %v952
      %v968 = vpack.c.b16 %v965, %v964
      %v969 = vpack.c.b16 %v967, %v966
      %v973 = vsel %vm691, %v933, 0
      %v976 = vsel %vm691, %v934, 0
      %v979 = vsel %vm691, %v935, 0
      %v982 = vsel %vm691, %v936, 0
      %v985 = vsel %vm691, %v937, 0
      %v988 = vsel %vm691, %v938, 0
      %v991 = vsel %vm691, %v939, 0
      %v994 = vsel %vm691, %v940, 0
      %v997 = vsel %vm691, %v941, 0
      %v1000 = vsel %vm691, %v942, 0
      %v1003 = vsel %vm691, %v943, 0
      %v1006 = vsel %vm691, %v944, 0
      %v1009 = vsel %vm691, %v945, 0
      %v1012 = vsel %vm691, %v946, 0
      %v1015 = vsel %vm691, %v947, 0
      %v1018 = vsel %vm691, %v948, 0
      %1020 = vmatprep.subr.bf16.mxu0 0
      %1021 = vmatpush1.bf16.msra.mxu0 %v968
      %1022 = vmatprep.subr.bf16.mxu0 0
      %1023 = vmatpush1.bf16.msra.mxu0 %v969
      %1024 = vmatprep.subr.bf16.mxu0 0
      %1025 = vmatpush1.bf16.msra.mxu0 0
      %1026 = vmatprep.subr.bf16.mxu0 0
      %1027 = vmatpush1.bf16.msra.mxu0 0
      %1028 = vmatprep.subr.bf16.mxu0 0
      %1029 = vmatpush1.bf16.msra.mxu0 0
      %1030 = vmatprep.subr.bf16.mxu0 0
      %1031 = vmatpush1.bf16.msra.mxu0 0
      %1032 = vmatprep.subr.bf16.mxu0 0
      %1033 = vmatpush1.bf16.msra.mxu0 0
      %1034 = vmatprep.subr.bf16.mxu0 0
      %1035 = vmatpush1.bf16.msra.mxu0 0
      %1036 = vmatprep.subr.bf16.mxu0 0
      %1037 = vmatpush1.bf16.msra.mxu0 0
      %1038 = vmatprep.subr.bf16.mxu0 0
      %1039 = vmatpush1.bf16.msra.mxu0 0
      %1040 = vmatprep.subr.bf16.mxu0 0
      %1041 = vmatpush1.bf16.msra.mxu0 0
      %1042 = vmatprep.subr.bf16.mxu0 0
      %1043 = vmatpush1.bf16.msra.mxu0 0
      %1044 = vmatprep.subr.bf16.mxu0 0
      %1045 = vmatpush1.bf16.msra.mxu0 0
      %1046 = vmatprep.subr.bf16.mxu0 0
      %1047 = vmatpush1.bf16.msra.mxu0 0
      %1048 = vmatprep.subr.bf16.mxu0 0
      %1049 = vmatpush1.bf16.msra.mxu0 0
      %1050 = vmatprep.subr.bf16.mxu0 0
      %1051 = vmatpush1.bf16.msra.mxu0 0
      %1052 = vmatprep.mubr.bf16.mxu0 0
      %1053 = vmatmul.mubr.bf16.gmra.mrb[0].mxu0 %v973
      %v1054 = vpop.f32.mrb[0].mxu0
      %v1055 = vadd.f32 %v958, %v1054
      %v1056 = vpop.f32.mrb[0].mxu0
      %v1057 = vpop.f32.mrb[0].mxu0
      %v1058 = vadd.f32 %v958, %v1057
      %v1059 = vpop.f32.mrb[0].mxu0
      %1060 = vmatprep.mubr.bf16.mxu0 0
      %1061 = vmatmul.mubr.bf16.gmra.mrb[0].mxu0 %v976
      %v1062 = vpop.f32.mrb[0].mxu0
      %v1063 = vadd.f32 %v958, %v1062
      %v1064 = vpop.f32.mrb[0].mxu0
      %v1065 = vpop.f32.mrb[0].mxu0
      %v1066 = vadd.f32 %v958, %v1065
      %v1067 = vpop.f32.mrb[0].mxu0
      %1068 = vmatprep.mubr.bf16.mxu0 0
      %1069 = vmatmul.mubr.bf16.gmra.mrb[0].mxu0 %v979
      %v1070 = vpop.f32.mrb[0].mxu0
      %v1071 = vadd.f32 %v958, %v1070
      %v1072 = vpop.f32.mrb[0].mxu0
      %v1073 = vpop.f32.mrb[0].mxu0
      %v1074 = vadd.f32 %v958, %v1073
      %v1075 = vpop.f32.mrb[0].mxu0
      %1076 = vmatprep.mubr.bf16.mxu0 0
      %1077 = vmatmul.mubr.bf16.gmra.mrb[0].mxu0 %v982
      %v1078 = vpop.f32.mrb[0].mxu0
      %v1079 = vadd.f32 %v958, %v1078
      %v1080 = vpop.f32.mrb[0].mxu0
      %v1081 = vpop.f32.mrb[0].mxu0
      %v1082 = vadd.f32 %v958, %v1081
      %v1083 = vpop.f32.mrb[0].mxu0
      %1084 = vmatprep.mubr.bf16.mxu0 0
      %1085 = vmatmul.mubr.bf16.gmra.mrb[0].mxu0 %v985
      %v1086 = vpop.f32.mrb[0].mxu0
      %v1087 = vadd.f32 %v958, %v1086
      %v1088 = vpop.f32.mrb[0].mxu0
      %v1089 = vpop.f32.mrb[0].mxu0
      %v1090 = vadd.f32 %v958, %v1089
      %v1091 = vpop.f32.mrb[0].mxu0
      %1092 = vmatprep.mubr.bf16.mxu0 0
      %1093 = vmatmul.mubr.bf16.gmra.mrb[0].mxu0 %v988
      %v1094 = vpop.f32.mrb[0].mxu0
      %v1095 = vadd.f32 %v958, %v1094
      %v1096 = vpop.f32.mrb[0].mxu0
      %v1097 = vpop.f32.mrb[0].mxu0
      %v1098 = vadd.f32 %v958, %v1097
      %v1099 = vpop.f32.mrb[0].mxu0
      %1100 = vmatprep.mubr.bf16.mxu0 0
      %1101 = vmatmul.mubr.bf16.gmra.mrb[0].mxu0 %v991
      %v1102 = vpop.f32.mrb[0].mxu0
      %v1103 = vadd.f32 %v958, %v1102
      %v1104 = vpop.f32.mrb[0].mxu0
      %v1105 = vpop.f32.mrb[0].mxu0
      %v1106 = vadd.f32 %v958, %v1105
      %v1107 = vpop.f32.mrb[0].mxu0
      %1108 = vmatprep.mubr.bf16.mxu0 0
      %1109 = vmatmul.mubr.bf16.gmra.mrb[0].mxu0 %v994
      %v1110 = vpop.f32.mrb[0].mxu0
      %v1111 = vadd.f32 %v958, %v1110
      %v1112 = vpop.f32.mrb[0].mxu0
      %v1113 = vpop.f32.mrb[0].mxu0
      %v1114 = vadd.f32 %v958, %v1113
      %v1115 = vpop.f32.mrb[0].mxu0
      %1116 = vmatprep.mubr.bf16.mxu0 0
      %1117 = vmatmul.mubr.bf16.gmra.mrb[0].mxu0 %v997
      %v1118 = vpop.f32.mrb[0].mxu0
      %v1119 = vadd.f32 %v958, %v1118
      %v1120 = vpop.f32.mrb[0].mxu0
      %v1121 = vpop.f32.mrb[0].mxu0
      %v1122 = vadd.f32 %v958, %v1121
      %v1123 = vpop.f32.mrb[0].mxu0
      %1124 = vmatprep.mubr.bf16.mxu0 0
      %1125 = vmatmul.mubr.bf16.gmra.mrb[0].mxu0 %v1000
      %v1126 = vpop.f32.mrb[0].mxu0
      %v1127 = vadd.f32 %v958, %v1126
      %v1128 = vpop.f32.mrb[0].mxu0
      %v1129 = vpop.f32.mrb[0].mxu0
      %v1130 = vadd.f32 %v958, %v1129
      %v1131 = vpop.f32.mrb[0].mxu0
      %1132 = vmatprep.mubr.bf16.mxu0 0
      %1133 = vmatmul.mubr.bf16.gmra.mrb[0].mxu0 %v1003
      %v1134 = vpop.f32.mrb[0].mxu0
      %v1135 = vadd.f32 %v958, %v1134
      %v1136 = vpop.f32.mrb[0].mxu0
      %v1137 = vpop.f32.mrb[0].mxu0
      %v1138 = vadd.f32 %v958, %v1137
      %v1139 = vpop.f32.mrb[0].mxu0
      %1140 = vmatprep.mubr.bf16.mxu0 0
      %1141 = vmatmul.mubr.bf16.gmra.mrb[0].mxu0 %v1006
      %v1142 = vpop.f32.mrb[0].mxu0
      %v1143 = vadd.f32 %v958, %v1142
      %v1144 = vpop.f32.mrb[0].mxu0
      %v1145 = vpop.f32.mrb[0].mxu0
      %v1146 = vadd.f32 %v958, %v1145
      %v1147 = vpop.f32.mrb[0].mxu0
      %1148 = vmatprep.mubr.bf16.mxu0 0
      %1149 = vmatmul.mubr.bf16.gmra.mrb[0].mxu0 %v1009
      %v1150 = vpop.f32.mrb[0].mxu0
      %v1151 = vadd.f32 %v958, %v1150
      %v1152 = vpop.f32.mrb[0].mxu0
      %v1153 = vpop.f32.mrb[0].mxu0
      %v1154 = vadd.f32 %v958, %v1153
      %v1155 = vpop.f32.mrb[0].mxu0
      %1156 = vmatprep.mubr.bf16.mxu0 0
      %1157 = vmatmul.mubr.bf16.gmra.mrb[0].mxu0 %v1012
      %v1158 = vpop.f32.mrb[0].mxu0
      %v1159 = vadd.f32 %v958, %v1158
      %v1160 = vpop.f32.mrb[0].mxu0
      %v1161 = vpop.f32.mrb[0].mxu0
      %v1162 = vadd.f32 %v958, %v1161
      %v1163 = vpop.f32.mrb[0].mxu0
      %1164 = vmatprep.mubr.bf16.mxu0 0
      %1165 = vmatmul.mubr.bf16.gmra.mrb[0].mxu0 %v1015
      %v1166 = vpop.f32.mrb[0].mxu0
      %v1167 = vadd.f32 %v958, %v1166
      %v1168 = vpop.f32.mrb[0].mxu0
      %v1169 = vpop.f32.mrb[0].mxu0
      %v1170 = vadd.f32 %v958, %v1169
      %v1171 = vpop.f32.mrb[0].mxu0
      %1172 = vmatprep.mubr.bf16.mxu0 0
      %1173 = vmatmul.mubr.bf16.gmra.mrb[0].mxu0 %v1018
      %v1174 = vpop.f32.mrb[0].mxu0
      %v1175 = vadd.f32 %v958, %v1174
      %v1176 = vpop.f32.mrb[0].mxu0
      %v1177 = vpop.f32.mrb[0].mxu0
      %v1178 = vadd.f32 %v958, %v1177
      %v1179 = vpop.f32.mrb[0].mxu0
      %1180 = vdwg.mxu0
      %vm1181 = vcmask 31744
      %1182 = vst.msk [vmem:[%s280] sm:$0xff] %vm1181, %v1055
      %1183 = vst.msk [vmem:[%s280 + $0x8] sm:$0xff] %vm1181, %v1058
      %1184 = vst.msk [vmem:[%s280 + $0x10] sm:$0xff] %vm1181, %v1063
      %1185 = vst.msk [vmem:[%s280 + $0x18] sm:$0xff] %vm1181, %v1066
      %1186 = vst.msk [vmem:[%s280 + $0x20] sm:$0xff] %vm1181, %v1071
      %1187 = vst.msk [vmem:[%s280 + $0x28] sm:$0xff] %vm1181, %v1074
      %1188 = vst.msk [vmem:[%s280 + $0x30] sm:$0xff] %vm1181, %v1079
      %1189 = vst.msk [vmem:[%s280 + $0x38] sm:$0xff] %vm1181, %v1082
      %1190 = vst.msk [vmem:[%s280 + $0x40] sm:$0xff] %vm1181, %v1087
      %1191 = vst.msk [vmem:[%s280 + $0x48] sm:$0xff] %vm1181, %v1090
      %1192 = vst.msk [vmem:[%s280 + $0x50] sm:$0xff] %vm1181, %v1095
      %1193 = vst.msk [vmem:[%s280 + $0x58] sm:$0xff] %vm1181, %v1098
      %1194 = vst.msk [vmem:[%s280 + $0x60] sm:$0xff] %vm1181, %v1103
      %1195 = vst.msk [vmem:[%s280 + $0x68] sm:$0xff] %vm1181, %v1106
      %1196 = vst.msk [vmem:[%s280 + $0x70] sm:$0xff] %vm1181, %v1111
      %1197 = vst.msk [vmem:[%s280 + $0x78] sm:$0xff] %vm1181, %v1114
      %1198 = vst.msk [vmem:[%s280 + $0x80] sm:$0xff] %vm1181, %v1119
      %1199 = vst.msk [vmem:[%s280 + $0x88] sm:$0xff] %vm1181, %v1122
      %1200 = vst.msk [vmem:[%s280 + $0x90] sm:$0xff] %vm1181, %v1127
      %1201 = vst.msk [vmem:[%s280 + $0x98] sm:$0xff] %vm1181, %v1130
      %1202 = vst.msk [vmem:[%s280 + $0xa0] sm:$0xff] %vm1181, %v1135
      %1203 = vst.msk [vmem:[%s280 + $0xa8] sm:$0xff] %vm1181, %v1138
      %1204 = vst.msk [vmem:[%s280 + $0xb0] sm:$0xff] %vm1181, %v1143
      %1205 = vst.msk [vmem:[%s280 + $0xb8] sm:$0xff] %vm1181, %v1146
      %1206 = vst.msk [vmem:[%s280 + $0xc0] sm:$0xff] %vm1181, %v1151
      %1207 = vst.msk [vmem:[%s280 + $0xc8] sm:$0xff] %vm1181, %v1154
      %1208 = vst.msk [vmem:[%s280 + $0xd0] sm:$0xff] %vm1181, %v1159
      %1209 = vst.msk [vmem:[%s280 + $0xd8] sm:$0xff] %vm1181, %v1162
      %1210 = vst.msk [vmem:[%s280 + $0xe0] sm:$0xff] %vm1181, %v1167
      %1211 = vst.msk [vmem:[%s280 + $0xe8] sm:$0xff] %vm1181, %v1170
      %1212 = vst.msk [vmem:[%s280 + $0xf0] sm:$0xff] %vm1181, %v1175
      %1213 = vst.msk [vmem:[%s280 + $0xf8] sm:$0xff] %vm1181, %v1178
      %s1214 = smul.u32 32, %s18
      %p1215 = scmp.lt.s32.totalorder %s1214, 63
      %s1216 = scalar_select %p1215, %s1214, 63
      %s1217 = smul.addr %s1216, 8
      %s1218 = scalar_lea.vmem %s7, %s1217
      // Predicated region
      $region49: #{tpu_custom_call.1} parent=47 // pred_check
        %p1219 = pneg %p188
      $region50: #{tpu_custom_call.1} parent=47 // pred_check_branch
        %1221 = sbr.rel (%p1219) target = $region52
      $region51: #{tpu_custom_call.1} parent=47 // pred_region
        %s1222 = smul.u32 32, %s18
      $region52: #{tpu_custom_call.1} parent=47 // pred_fallthru
        _
    $region48: #{tpu_custom_call.1} parent=5 // pred_fallthru
      _
    %p1223 = scmp.le.s32.totalorder 2, %s13
    // Predicated region
    $region53: #{tpu_custom_call.1} parent=5 // pred_check
      %p1224 = pneg %p1223
    $region54: #{tpu_custom_call.1} parent=5 // pred_check_branch
      %1226 = sbr.rel (%p1224) target = $region56
    $region55: #{tpu_custom_call.1} parent=5 // pred_region
      %s1227 = ssub.s32 %s13, 2
      // Predicated region
      $region57: #{tpu_custom_call.1} parent=55 // pred_check
        %p1228 = pneg %p194
      $region58: #{tpu_custom_call.1} parent=55 // pred_check_branch
        %1230 = sbr.rel (%p1228) target = $region60
      $region59: #{tpu_custom_call.1} parent=55 // pred_region
        %s1231 = smul.u32 32, %s19
        %p1232 = scmp.lt.s32.totalorder %s1231, 63
        %s1233 = scalar_select %p1232, %s1231, 63
        %s1234 = smul.addr %s1233, 8
        %s1235 = scalar_lea.vmem %s7, %s1234
      $region60: #{tpu_custom_call.1} parent=55 // pred_fallthru
        _
    $region56: #{tpu_custom_call.1} parent=5 // pred_fallthru
      _
  $region6: #{tpu_custom_call.1} parent=0 // loop_footer
    %s17 = sadd.s32 1, %s13
  $region7: #{tpu_custom_call.1} parent=0 // loop_footer_branch
    %12 = sbr.rel target = $region3
  $region8: #{tpu_custom_call.1} parent=0 // loop_exit
    _

</llo_original>
